<compile_context>
chip_gen: v7x
topology: tpu7x:2x2x1
jax: 0.10.0
libtpu: 0.0.40
codegen_flags: <defaults>
</compile_context>

<pallas_src>
import functools

import jax
import jax.numpy as jnp
from jax.experimental import pallas as pl
from jax.experimental.pallas import tpu as pltpu


NEG_SLOPE = 0.2      # DGL GATConv default leaky_relu negative slope
MASK_VAL = -1e30     # "minus infinity" for non-edges (stays in f32 softmax math)


def _gat2_kernel(x_ref, adj_ref, w1_ref, al1_ref, ar1_ref, sel1_ref, b1_ref,
                 w2_ref, al2_ref, ar2_ref, b2_ref, out_ref, *, num_heads):
    """Fused: GAT(H heads) -> ReLU -> (dropout: eval id) -> GAT(1 head)."""
    x = x_ref[...]                               # (N, F_in)
    edge = adj_ref[...] > 0.0                    # (N, N) hoisted, shared by both layers

    # ---------------- layer 1: multi-head GAT + fused ReLU ----------------
    z = jnp.dot(x, w1_ref[...], preferred_element_type=jnp.float32)    # (N, H*F1)
    el = jnp.dot(z, al1_ref[...], preferred_element_type=jnp.float32)  # (N, H) src scores
    er = jnp.dot(z, ar1_ref[...], preferred_element_type=jnp.float32)  # (N, H) dst scores
    el_t = jnp.transpose(el)                     # (H, N): one small XLU transpose total

    alphas = []
    for hd in range(num_heads):                  # static unrolled; (N,N) VPU/EUP work only
        e = er[:, hd:hd + 1] + el_t[hd:hd + 1, :]            # e[dst,src]
        e = jnp.where(e > 0, e, NEG_SLOPE * e)               # leaky relu
        e = jnp.where(edge, e, jnp.float32(MASK_VAL))        # mask non-edges
        p = jnp.exp(e - jnp.max(e, axis=1, keepdims=True))
        inv = pl.reciprocal(jnp.sum(p, axis=1, keepdims=True), approx=True)
        alphas.append(p * inv)                               # (N, N)

    # one K = H*N matmul instead of H small K=N matmuls + concatenate
    alpha_cat = jnp.concatenate(alphas, axis=1)              # (N, H*N)
    sel = sel1_ref[...]                                      # (H, H*F1) head-column selectors
    z_bd = jnp.concatenate(
        [z * sel[hd:hd + 1, :] for hd in range(num_heads)], axis=0)   # (H*N, H*F1) block-diag
    h1 = jnp.dot(alpha_cat, z_bd, preferred_element_type=jnp.float32) + b1_ref[...]
    h1 = jnp.maximum(h1, 0.0)                                # fused ReLU (dropout = identity)

    # ---------------- layer 2: single-head GAT (lane-dense padded out) ----------------
    z2 = jnp.dot(h1, w2_ref[...], preferred_element_type=jnp.float32)   # (N, OUT_PAD)
    el2 = jnp.dot(z2, al2_ref[...], preferred_element_type=jnp.float32) # (N, 1)
    er2 = jnp.dot(z2, ar2_ref[...], preferred_element_type=jnp.float32) # (N, 1)
    e2 = er2 + jnp.transpose(el2)
    e2 = jnp.where(e2 > 0, e2, NEG_SLOPE * e2)
    e2 = jnp.where(edge, e2, jnp.float32(MASK_VAL))
    p2 = jnp.exp(e2 - jnp.max(e2, axis=1, keepdims=True))
    inv2 = pl.reciprocal(jnp.sum(p2, axis=1, keepdims=True), approx=True)
    alpha2 = p2 * inv2
    out_ref[...] = jnp.dot(alpha2, z2, preferred_element_type=jnp.float32) + b2_ref[...]


def pack_params(params):
    """One-time parameter packing (block-diag score mats, lane-dense padding)."""
    H, F1, OUT = params["num_heads"], params["hid_size"], params["out_size"]
    hf = H * F1
    out_pad = max(128, ((OUT + 127) // 128) * 128)           # lane-dense output width

    head_of_col = jnp.repeat(jnp.arange(H), F1)              # (H*F1,)
    sel1 = (head_of_col[None, :] == jnp.arange(H)[:, None]).astype(jnp.float32)  # (H, H*F1)
    al1_bd = params["al1"].reshape(-1)[:, None] * sel1.T     # (H*F1, H) block-diagonal
    ar1_bd = params["ar1"].reshape(-1)[:, None] * sel1.T     # (H*F1, H)

    w2p = jnp.zeros((hf, out_pad), jnp.float32).at[:, :OUT].set(params["w2"])
    al2p = jnp.zeros((out_pad, 1), jnp.float32).at[:OUT, 0].set(params["al2"].reshape(-1))
    ar2p = jnp.zeros((out_pad, 1), jnp.float32).at[:OUT, 0].set(params["ar2"].reshape(-1))
    b2p = jnp.zeros((1, out_pad), jnp.float32).at[:, :OUT].set(params["b2"])

    return dict(num_heads=H, out_size=OUT, out_pad=out_pad,
                w1=params["w1"], al1_bd=al1_bd, ar1_bd=ar1_bd, sel1=sel1, b1=params["b1"],
                w2p=w2p, al2p=al2p, ar2p=ar2p, b2p=b2p)


def gnn_forward(adj, x, packed):
    """YourGNNModel.forward, fused into one pallas_call."""
    n = x.shape[0]
    out_pad = packed["out_pad"]
    kernel = functools.partial(_gat2_kernel, num_heads=packed["num_heads"])
    vmem = pl.BlockSpec(memory_space=pltpu.MemorySpace.VMEM)
    out = pl.pallas_call(
        kernel,
        out_shape=jax.ShapeDtypeStruct((n, out_pad), jnp.float32),
        in_specs=[vmem] * 11,
        out_specs=vmem,
    )(x, adj, packed["w1"], packed["al1_bd"], packed["ar1_bd"], packed["sel1"],
      packed["b1"], packed["w2p"], packed["al2p"], packed["ar2p"], packed["b2p"])
    return out[:, :packed["out_size"]]


# ----------------------- pure-JAX reference (for checking) -----------------------
def _gat_layer_ref(h, adj, w, al, ar, b, num_heads, out_feat, apply_relu):
    z = h @ w
    outs = []
    for hd in range(num_heads):
        z_h = z[:, hd * out_feat:(hd + 1) * out_feat]
        el = (z_h * al[hd]).sum(-1)
        er = (z_h * ar[hd]).sum(-1)
        e = er[:, None] + el[None, :]
        e = jnp.where(e > 0, e, NEG_SLOPE * e)
        e = jnp.where(adj > 0, e, MASK_VAL)
        e = e - e.max(axis=1, keepdims=True)
        p = jnp.exp(e)
        alpha = p / p.sum(axis=1, keepdims=True)
        outs.append(alpha @ z_h)
    out = jnp.concatenate(outs, axis=1) + b
    return jnp.maximum(out, 0.0) if apply_relu else out


def gnn_forward_ref(adj, x, p):
    h = _gat_layer_ref(x, adj, p["w1"], p["al1"], p["ar1"], p["b1"],
                       p["num_heads"], p["hid_size"], True)
    return _gat_layer_ref(h, adj, p["w2"], p["al2"], p["ar2"], p["b2"],
                          1, p["out_size"], False)


if __name__ == "__main__":
    N, IN_SIZE, HID_SIZE, OUT_SIZE, NUM_HEADS = 32, 16, 8, 7, 4

    key = jax.random.PRNGKey(0)
    ks = jax.random.split(key, 10)

    # graph: random directed edges + self loops (every node has an in-edge)
    adj = (jax.random.uniform(ks[0], (N, N)) < 0.25).astype(jnp.float32)
    adj = jnp.maximum(adj, jnp.eye(N, dtype=jnp.float32))

    x = jax.random.normal(ks[1], (N, IN_SIZE), dtype=jnp.float32)

    s = 0.1
    params = {
        "num_heads": NUM_HEADS, "hid_size": HID_SIZE, "out_size": OUT_SIZE,
        # layer1: GATConv(in_size, hid_size, num_heads)
        "w1": s * jax.random.normal(ks[2], (IN_SIZE, NUM_HEADS * HID_SIZE), jnp.float32),
        "al1": s * jax.random.normal(ks[3], (NUM_HEADS, HID_SIZE), jnp.float32),
        "ar1": s * jax.random.normal(ks[4], (NUM_HEADS, HID_SIZE), jnp.float32),
        "b1": s * jax.random.normal(ks[5], (1, NUM_HEADS * HID_SIZE), jnp.float32),
        # layer2: GATConv(hid_size * num_heads, out_size, 1)
        "w2": s * jax.random.normal(ks[6], (NUM_HEADS * HID_SIZE, OUT_SIZE), jnp.float32),
        "al2": s * jax.random.normal(ks[7], (1, OUT_SIZE), jnp.float32),
        "ar2": s * jax.random.normal(ks[8], (1, OUT_SIZE), jnp.float32),
        "b2": s * jax.random.normal(ks[9], (1, OUT_SIZE), jnp.float32),
    }

    packed = jax.tree_util.tree_map(jax.block_until_ready, pack_params(params))

    out = jax.block_until_ready(gnn_forward(adj, x, packed))
    ref = jax.block_until_ready(gnn_forward_ref(adj, x, params))

    assert out.shape == (N, OUT_SIZE), out.shape
    # tolerance covers the approx (EUP) reciprocal in the softmax normalization
    assert jnp.allclose(out, ref, rtol=2e-3, atol=2e-3), \
        f"max err {jnp.max(jnp.abs(out - ref))}"
    print("KERNEL_OK")
</pallas_src>

<mosaic_0001>
module attributes {stable_mosaic.version = 11 : i64} {
  func.func @_gat2_kernel(%arg0: memref<32x16xf32, #tpu.memory_space<vmem>>, %arg1: memref<32x32xf32, #tpu.memory_space<vmem>>, %arg2: memref<16x32xf32, #tpu.memory_space<vmem>>, %arg3: memref<32x4xf32, #tpu.memory_space<vmem>>, %arg4: memref<32x4xf32, #tpu.memory_space<vmem>>, %arg5: memref<4x32xf32, #tpu.memory_space<vmem>>, %arg6: memref<1x32xf32, #tpu.memory_space<vmem>>, %arg7: memref<32x128xf32, #tpu.memory_space<vmem>>, %arg8: memref<128x1xf32, #tpu.memory_space<vmem>>, %arg9: memref<128x1xf32, #tpu.memory_space<vmem>>, %arg10: memref<1x128xf32, #tpu.memory_space<vmem>>, %arg11: memref<32x128xf32, #tpu.memory_space<vmem>>) attributes {dimension_semantics = [], scalar_prefetch = 0 : i64, scratch_operands = 0 : i64, tpu.core_type = #tpu.core_type<tc>} {
    %c0 = arith.constant 0 : index
    %c0_0 = arith.constant 0 : index
    %0 = vector.load %arg0[%c0, %c0_0] : memref<32x16xf32, #tpu.memory_space<vmem>>, vector<32x16xf32>
    %c0_1 = arith.constant 0 : index
    %c0_2 = arith.constant 0 : index
    %1 = vector.load %arg1[%c0_1, %c0_2] : memref<32x32xf32, #tpu.memory_space<vmem>>, vector<32x32xf32>
    %cst = arith.constant 0.000000e+00 : f32
    %2 = vector.broadcast %cst : f32 to vector<32x32xf32>
    %3 = arith.cmpf ogt, %1, %2 : vector<32x32xf32>
    %c0_3 = arith.constant 0 : index
    %c0_4 = arith.constant 0 : index
    %4 = vector.load %arg2[%c0_3, %c0_4] : memref<16x32xf32, #tpu.memory_space<vmem>>, vector<16x32xf32>
    %cst_5 = arith.constant dense<0.000000e+00> : vector<32x32xf32>
    %5 = tpu.matmul %0, %4, %cst_5 {dimension_numbers = #tpu.dot_dimension_numbers<[1], [0], [0], [1], [0, 0, 1, 1], [], []>} : vector<32x16xf32>, vector<16x32xf32>, vector<32x32xf32> -> vector<32x32xf32>
    %c0_6 = arith.constant 0 : index
    %c0_7 = arith.constant 0 : index
    %6 = vector.load %arg3[%c0_6, %c0_7] : memref<32x4xf32, #tpu.memory_space<vmem>>, vector<32x4xf32>
    %cst_8 = arith.constant dense<0.000000e+00> : vector<32x4xf32>
    %7 = tpu.matmul %5, %6, %cst_8 {dimension_numbers = #tpu.dot_dimension_numbers<[1], [0], [0], [1], [0, 0, 1, 1], [], []>} : vector<32x32xf32>, vector<32x4xf32>, vector<32x4xf32> -> vector<32x4xf32>
    %c0_9 = arith.constant 0 : index
    %c0_10 = arith.constant 0 : index
    %8 = vector.load %arg4[%c0_9, %c0_10] : memref<32x4xf32, #tpu.memory_space<vmem>>, vector<32x4xf32>
    %cst_11 = arith.constant dense<0.000000e+00> : vector<32x4xf32>
    %9 = tpu.matmul %5, %8, %cst_11 {dimension_numbers = #tpu.dot_dimension_numbers<[1], [0], [0], [1], [0, 0, 1, 1], [], []>} : vector<32x32xf32>, vector<32x4xf32>, vector<32x4xf32> -> vector<32x4xf32>
    %10 = tpu.transpose %7, [1, 0] : vector<32x4xf32> -> vector<4x32xf32>
    %11 = vector.extract_strided_slice %9 {offsets = [0, 0], sizes = [32, 1], strides = [1, 1]} : vector<32x4xf32> to vector<32x1xf32>
    %12 = vector.extract_strided_slice %10 {offsets = [0, 0], sizes = [1, 32], strides = [1, 1]} : vector<4x32xf32> to vector<1x32xf32>
    %13 = vector.broadcast %11 : vector<32x1xf32> to vector<32x32xf32>
    %14 = vector.broadcast %12 : vector<1x32xf32> to vector<32x32xf32>
    %15 = arith.addf %13, %14 : vector<32x32xf32>
    %cst_12 = arith.constant 0.000000e+00 : f32
    %16 = vector.broadcast %cst_12 : f32 to vector<32x32xf32>
    %17 = arith.cmpf ogt, %15, %16 : vector<32x32xf32>
    %cst_13 = arith.constant 2.000000e-01 : f32
    %18 = vector.broadcast %cst_13 : f32 to vector<32x32xf32>
    %19 = arith.mulf %18, %15 : vector<32x32xf32>
    %20 = arith.select %17, %15, %19 : vector<32x32xi1>, vector<32x32xf32>
    %cst_14 = arith.constant -1.000000e+30 : f32
    %21 = vector.broadcast %cst_14 : f32 to vector<32x32xf32>
    %22 = arith.select %3, %20, %21 : vector<32x32xi1>, vector<32x32xf32>
    %cst_15 = arith.constant dense<0xFF800000> : vector<32xf32>
    %23 = vector.multi_reduction <maximumf>, %22, %cst_15 [1] : vector<32x32xf32> to vector<32xf32>
    %24 = vector.shape_cast %23 : vector<32xf32> to vector<32x1xf32>
    %25 = vector.broadcast %24 : vector<32x1xf32> to vector<32x32xf32>
    %26 = arith.subf %22, %25 : vector<32x32xf32>
    %27 = math.exp %26 : vector<32x32xf32>
    %cst_16 = arith.constant dense<0.000000e+00> : vector<32xf32>
    %28 = vector.multi_reduction <add>, %27, %cst_16 [1] : vector<32x32xf32> to vector<32xf32>
    %29 = vector.shape_cast %28 : vector<32xf32> to vector<32x1xf32>
    %30 = tpu.reciprocal %29 {approx = true} : vector<32x1xf32> -> vector<32x1xf32>
    %31 = vector.broadcast %30 : vector<32x1xf32> to vector<32x32xf32>
    %32 = arith.mulf %27, %31 : vector<32x32xf32>
    %33 = vector.extract_strided_slice %9 {offsets = [0, 1], sizes = [32, 1], strides = [1, 1]} : vector<32x4xf32> to vector<32x1xf32>
    %34 = vector.extract_strided_slice %10 {offsets = [1, 0], sizes = [1, 32], strides = [1, 1]} : vector<4x32xf32> to vector<1x32xf32>
    %35 = vector.broadcast %33 : vector<32x1xf32> to vector<32x32xf32>
    %36 = vector.broadcast %34 : vector<1x32xf32> to vector<32x32xf32>
    %37 = arith.addf %35, %36 : vector<32x32xf32>
    %cst_17 = arith.constant 0.000000e+00 : f32
    %38 = vector.broadcast %cst_17 : f32 to vector<32x32xf32>
    %39 = arith.cmpf ogt, %37, %38 : vector<32x32xf32>
    %cst_18 = arith.constant 2.000000e-01 : f32
    %40 = vector.broadcast %cst_18 : f32 to vector<32x32xf32>
    %41 = arith.mulf %40, %37 : vector<32x32xf32>
    %42 = arith.select %39, %37, %41 : vector<32x32xi1>, vector<32x32xf32>
    %cst_19 = arith.constant -1.000000e+30 : f32
    %43 = vector.broadcast %cst_19 : f32 to vector<32x32xf32>
    %44 = arith.select %3, %42, %43 : vector<32x32xi1>, vector<32x32xf32>
    %cst_20 = arith.constant dense<0xFF800000> : vector<32xf32>
    %45 = vector.multi_reduction <maximumf>, %44, %cst_20 [1] : vector<32x32xf32> to vector<32xf32>
    %46 = vector.shape_cast %45 : vector<32xf32> to vector<32x1xf32>
    %47 = vector.broadcast %46 : vector<32x1xf32> to vector<32x32xf32>
    %48 = arith.subf %44, %47 : vector<32x32xf32>
    %49 = math.exp %48 : vector<32x32xf32>
    %cst_21 = arith.constant dense<0.000000e+00> : vector<32xf32>
    %50 = vector.multi_reduction <add>, %49, %cst_21 [1] : vector<32x32xf32> to vector<32xf32>
    %51 = vector.shape_cast %50 : vector<32xf32> to vector<32x1xf32>
    %52 = tpu.reciprocal %51 {approx = true} : vector<32x1xf32> -> vector<32x1xf32>
    %53 = vector.broadcast %52 : vector<32x1xf32> to vector<32x32xf32>
    %54 = arith.mulf %49, %53 : vector<32x32xf32>
    %55 = vector.extract_strided_slice %9 {offsets = [0, 2], sizes = [32, 1], strides = [1, 1]} : vector<32x4xf32> to vector<32x1xf32>
    %56 = vector.extract_strided_slice %10 {offsets = [2, 0], sizes = [1, 32], strides = [1, 1]} : vector<4x32xf32> to vector<1x32xf32>
    %57 = vector.broadcast %55 : vector<32x1xf32> to vector<32x32xf32>
    %58 = vector.broadcast %56 : vector<1x32xf32> to vector<32x32xf32>
    %59 = arith.addf %57, %58 : vector<32x32xf32>
    %cst_22 = arith.constant 0.000000e+00 : f32
    %60 = vector.broadcast %cst_22 : f32 to vector<32x32xf32>
    %61 = arith.cmpf ogt, %59, %60 : vector<32x32xf32>
    %cst_23 = arith.constant 2.000000e-01 : f32
    %62 = vector.broadcast %cst_23 : f32 to vector<32x32xf32>
    %63 = arith.mulf %62, %59 : vector<32x32xf32>
    %64 = arith.select %61, %59, %63 : vector<32x32xi1>, vector<32x32xf32>
    %cst_24 = arith.constant -1.000000e+30 : f32
    %65 = vector.broadcast %cst_24 : f32 to vector<32x32xf32>
    %66 = arith.select %3, %64, %65 : vector<32x32xi1>, vector<32x32xf32>
    %cst_25 = arith.constant dense<0xFF800000> : vector<32xf32>
    %67 = vector.multi_reduction <maximumf>, %66, %cst_25 [1] : vector<32x32xf32> to vector<32xf32>
    %68 = vector.shape_cast %67 : vector<32xf32> to vector<32x1xf32>
    %69 = vector.broadcast %68 : vector<32x1xf32> to vector<32x32xf32>
    %70 = arith.subf %66, %69 : vector<32x32xf32>
    %71 = math.exp %70 : vector<32x32xf32>
    %cst_26 = arith.constant dense<0.000000e+00> : vector<32xf32>
    %72 = vector.multi_reduction <add>, %71, %cst_26 [1] : vector<32x32xf32> to vector<32xf32>
    %73 = vector.shape_cast %72 : vector<32xf32> to vector<32x1xf32>
    %74 = tpu.reciprocal %73 {approx = true} : vector<32x1xf32> -> vector<32x1xf32>
    %75 = vector.broadcast %74 : vector<32x1xf32> to vector<32x32xf32>
    %76 = arith.mulf %71, %75 : vector<32x32xf32>
    %77 = vector.extract_strided_slice %9 {offsets = [0, 3], sizes = [32, 1], strides = [1, 1]} : vector<32x4xf32> to vector<32x1xf32>
    %78 = vector.extract_strided_slice %10 {offsets = [3, 0], sizes = [1, 32], strides = [1, 1]} : vector<4x32xf32> to vector<1x32xf32>
    %79 = vector.broadcast %77 : vector<32x1xf32> to vector<32x32xf32>
    %80 = vector.broadcast %78 : vector<1x32xf32> to vector<32x32xf32>
    %81 = arith.addf %79, %80 : vector<32x32xf32>
    %cst_27 = arith.constant 0.000000e+00 : f32
    %82 = vector.broadcast %cst_27 : f32 to vector<32x32xf32>
    %83 = arith.cmpf ogt, %81, %82 : vector<32x32xf32>
    %cst_28 = arith.constant 2.000000e-01 : f32
    %84 = vector.broadcast %cst_28 : f32 to vector<32x32xf32>
    %85 = arith.mulf %84, %81 : vector<32x32xf32>
    %86 = arith.select %83, %81, %85 : vector<32x32xi1>, vector<32x32xf32>
    %cst_29 = arith.constant -1.000000e+30 : f32
    %87 = vector.broadcast %cst_29 : f32 to vector<32x32xf32>
    %88 = arith.select %3, %86, %87 : vector<32x32xi1>, vector<32x32xf32>
    %cst_30 = arith.constant dense<0xFF800000> : vector<32xf32>
    %89 = vector.multi_reduction <maximumf>, %88, %cst_30 [1] : vector<32x32xf32> to vector<32xf32>
    %90 = vector.shape_cast %89 : vector<32xf32> to vector<32x1xf32>
    %91 = vector.broadcast %90 : vector<32x1xf32> to vector<32x32xf32>
    %92 = arith.subf %88, %91 : vector<32x32xf32>
    %93 = math.exp %92 : vector<32x32xf32>
    %cst_31 = arith.constant dense<0.000000e+00> : vector<32xf32>
    %94 = vector.multi_reduction <add>, %93, %cst_31 [1] : vector<32x32xf32> to vector<32xf32>
    %95 = vector.shape_cast %94 : vector<32xf32> to vector<32x1xf32>
    %96 = tpu.reciprocal %95 {approx = true} : vector<32x1xf32> -> vector<32x1xf32>
    %97 = vector.broadcast %96 : vector<32x1xf32> to vector<32x32xf32>
    %98 = arith.mulf %93, %97 : vector<32x32xf32>
    %99 = tpu.concatenate %32, %54, %76, %98 in 1 : vector<32x32xf32>, vector<32x32xf32>, vector<32x32xf32>, vector<32x32xf32> -> vector<32x128xf32>
    %c0_32 = arith.constant 0 : index
    %c0_33 = arith.constant 0 : index
    %100 = vector.load %arg5[%c0_32, %c0_33] : memref<4x32xf32, #tpu.memory_space<vmem>>, vector<4x32xf32>
    %101 = vector.extract_strided_slice %100 {offsets = [0, 0], sizes = [1, 32], strides = [1, 1]} : vector<4x32xf32> to vector<1x32xf32>
    %102 = vector.broadcast %101 : vector<1x32xf32> to vector<32x32xf32>
    %103 = arith.mulf %5, %102 : vector<32x32xf32>
    %104 = vector.extract_strided_slice %100 {offsets = [1, 0], sizes = [1, 32], strides = [1, 1]} : vector<4x32xf32> to vector<1x32xf32>
    %105 = vector.broadcast %104 : vector<1x32xf32> to vector<32x32xf32>
    %106 = arith.mulf %5, %105 : vector<32x32xf32>
    %107 = vector.extract_strided_slice %100 {offsets = [2, 0], sizes = [1, 32], strides = [1, 1]} : vector<4x32xf32> to vector<1x32xf32>
    %108 = vector.broadcast %107 : vector<1x32xf32> to vector<32x32xf32>
    %109 = arith.mulf %5, %108 : vector<32x32xf32>
    %110 = vector.extract_strided_slice %100 {offsets = [3, 0], sizes = [1, 32], strides = [1, 1]} : vector<4x32xf32> to vector<1x32xf32>
    %111 = vector.broadcast %110 : vector<1x32xf32> to vector<32x32xf32>
    %112 = arith.mulf %5, %111 : vector<32x32xf32>
    %113 = tpu.concatenate %103, %106, %109, %112 in 0 : vector<32x32xf32>, vector<32x32xf32>, vector<32x32xf32>, vector<32x32xf32> -> vector<128x32xf32>
    %cst_34 = arith.constant dense<0.000000e+00> : vector<32x32xf32>
    %114 = tpu.matmul %99, %113, %cst_34 {dimension_numbers = #tpu.dot_dimension_numbers<[1], [0], [0], [1], [0, 0, 1, 1], [], []>} : vector<32x128xf32>, vector<128x32xf32>, vector<32x32xf32> -> vector<32x32xf32>
    %c0_35 = arith.constant 0 : index
    %c0_36 = arith.constant 0 : index
    %115 = vector.load %arg6[%c0_35, %c0_36] : memref<1x32xf32, #tpu.memory_space<vmem>>, vector<1x32xf32>
    %116 = vector.broadcast %115 : vector<1x32xf32> to vector<32x32xf32>
    %117 = arith.addf %114, %116 : vector<32x32xf32>
    %cst_37 = arith.constant 0.000000e+00 : f32
    %118 = vector.broadcast %cst_37 : f32 to vector<32x32xf32>
    %119 = arith.maximumf %117, %118 : vector<32x32xf32>
    %c0_38 = arith.constant 0 : index
    %c0_39 = arith.constant 0 : index
    %120 = vector.load %arg7[%c0_38, %c0_39] : memref<32x128xf32, #tpu.memory_space<vmem>>, vector<32x128xf32>
    %cst_40 = arith.constant dense<0.000000e+00> : vector<32x128xf32>
    %121 = tpu.matmul %119, %120, %cst_40 {dimension_numbers = #tpu.dot_dimension_numbers<[1], [0], [0], [1], [0, 0, 1, 1], [], []>} : vector<32x32xf32>, vector<32x128xf32>, vector<32x128xf32> -> vector<32x128xf32>
    %c0_41 = arith.constant 0 : index
    %c0_42 = arith.constant 0 : index
    %122 = vector.load %arg8[%c0_41, %c0_42] : memref<128x1xf32, #tpu.memory_space<vmem>>, vector<128x1xf32>
    %cst_43 = arith.constant dense<0.000000e+00> : vector<32x1xf32>
    %123 = tpu.matmul %121, %122, %cst_43 {dimension_numbers = #tpu.dot_dimension_numbers<[1], [0], [0], [1], [0, 0, 1, 1], [], []>} : vector<32x128xf32>, vector<128x1xf32>, vector<32x1xf32> -> vector<32x1xf32>
    %c0_44 = arith.constant 0 : index
    %c0_45 = arith.constant 0 : index
    %124 = vector.load %arg9[%c0_44, %c0_45] : memref<128x1xf32, #tpu.memory_space<vmem>>, vector<128x1xf32>
    %cst_46 = arith.constant dense<0.000000e+00> : vector<32x1xf32>
    %125 = tpu.matmul %121, %124, %cst_46 {dimension_numbers = #tpu.dot_dimension_numbers<[1], [0], [0], [1], [0, 0, 1, 1], [], []>} : vector<32x128xf32>, vector<128x1xf32>, vector<32x1xf32> -> vector<32x1xf32>
    %126 = tpu.transpose %123, [1, 0] : vector<32x1xf32> -> vector<1x32xf32>
    %127 = vector.broadcast %125 : vector<32x1xf32> to vector<32x32xf32>
    %128 = vector.broadcast %126 : vector<1x32xf32> to vector<32x32xf32>
    %129 = arith.addf %127, %128 : vector<32x32xf32>
    %cst_47 = arith.constant 0.000000e+00 : f32
    %130 = vector.broadcast %cst_47 : f32 to vector<32x32xf32>
    %131 = arith.cmpf ogt, %129, %130 : vector<32x32xf32>
    %cst_48 = arith.constant 2.000000e-01 : f32
    %132 = vector.broadcast %cst_48 : f32 to vector<32x32xf32>
    %133 = arith.mulf %132, %129 : vector<32x32xf32>
    %134 = arith.select %131, %129, %133 : vector<32x32xi1>, vector<32x32xf32>
    %cst_49 = arith.constant -1.000000e+30 : f32
    %135 = vector.broadcast %cst_49 : f32 to vector<32x32xf32>
    %136 = arith.select %3, %134, %135 : vector<32x32xi1>, vector<32x32xf32>
    %cst_50 = arith.constant dense<0xFF800000> : vector<32xf32>
    %137 = vector.multi_reduction <maximumf>, %136, %cst_50 [1] : vector<32x32xf32> to vector<32xf32>
    %138 = vector.shape_cast %137 : vector<32xf32> to vector<32x1xf32>
    %139 = vector.broadcast %138 : vector<32x1xf32> to vector<32x32xf32>
    %140 = arith.subf %136, %139 : vector<32x32xf32>
    %141 = math.exp %140 : vector<32x32xf32>
    %cst_51 = arith.constant dense<0.000000e+00> : vector<32xf32>
    %142 = vector.multi_reduction <add>, %141, %cst_51 [1] : vector<32x32xf32> to vector<32xf32>
    %143 = vector.shape_cast %142 : vector<32xf32> to vector<32x1xf32>
    %144 = tpu.reciprocal %143 {approx = true} : vector<32x1xf32> -> vector<32x1xf32>
    %145 = vector.broadcast %144 : vector<32x1xf32> to vector<32x32xf32>
    %146 = arith.mulf %141, %145 : vector<32x32xf32>
    %cst_52 = arith.constant dense<0.000000e+00> : vector<32x128xf32>
    %147 = tpu.matmul %146, %121, %cst_52 {dimension_numbers = #tpu.dot_dimension_numbers<[1], [0], [0], [1], [0, 0, 1, 1], [], []>} : vector<32x32xf32>, vector<32x128xf32>, vector<32x128xf32> -> vector<32x128xf32>
    %c0_53 = arith.constant 0 : index
    %c0_54 = arith.constant 0 : index
    %148 = vector.load %arg10[%c0_53, %c0_54] : memref<1x128xf32, #tpu.memory_space<vmem>>, vector<1x128xf32>
    %149 = vector.broadcast %148 : vector<1x128xf32> to vector<32x128xf32>
    %150 = arith.addf %147, %149 : vector<32x128xf32>
    %c0_55 = arith.constant 0 : index
    %c0_56 = arith.constant 0 : index
    %151 = vector.load %arg11[%c0_55, %c0_56] : memref<32x128xf32, #tpu.memory_space<vmem>>, vector<32x128xf32>
    tpu.vector_store %arg11[%c0_55, %c0_56], %150 {strides = array<i32>} : memref<32x128xf32, #tpu.memory_space<vmem>>, vector<32x128xf32>,
    return
  }
}

</mosaic_0001>

<llo_original>
// kernel: tpu_custom_call.1
$region0: #{tpu_custom_call.1}
  #allocation0 [shape = 'u32[]', space=smem, size = 0x4, offset = 0x4, fixed_abs, tag = 'smem constant byte address 0x4 - core index']
  #allocation1 [shape = 'u32[144,128]{1,0:T(1,128)}', space=vmem, size = 0x12000, scoped, tag = 'internal scratch']
  %s0 = inlined_call_operand.vmem [shape: f32[32,16], index: 0, kind: input, shape index: {}]
  %s1 = inlined_call_operand.vmem [shape: f32[32,32], index: 1, kind: input, shape index: {}]
  %s2 = inlined_call_operand.vmem [shape: f32[16,32], index: 2, kind: input, shape index: {}]
  %s3 = inlined_call_operand.vmem [shape: f32[32,4], index: 3, kind: input, shape index: {}]
  %s4 = inlined_call_operand.vmem [shape: f32[32,4], index: 4, kind: input, shape index: {}]
  %s5 = inlined_call_operand.vmem [shape: f32[4,32], index: 5, kind: input, shape index: {}]
  %s6 = inlined_call_operand.vmem [shape: f32[1,32], index: 6, kind: input, shape index: {}]
  %s7 = inlined_call_operand.vmem [shape: f32[32,128], index: 7, kind: input, shape index: {}]
  %s8 = inlined_call_operand.vmem [shape: f32[128,1], index: 8, kind: input, shape index: {}]
  %s9 = inlined_call_operand.vmem [shape: f32[128,1], index: 9, kind: input, shape index: {}]
  %s10 = inlined_call_operand.vmem [shape: f32[1,128], index: 10, kind: input, shape index: {}]
  %s11 = inlined_call_operand.hbm [shape: f32[32,128], index: 11, kind: output, shape index: {}]
  %s12 = sld [smem:[#allocation0]]
  $region54: #{tpu_custom_call.1} parent=0
    _
  %s14 = ssub.s32 1, %s12
  %s15 = scalar_select 0, %s14, %s12
  $region1: #{tpu_custom_call.1} parent=0
    #allocation2 [shape = 'u8[16384]{0}', space=vmem, size = 0x4000, scoped, tag = 'output window, operand 0, single buffered']
    #allocation3 [shape = 's32[1]{0}', space=sflag, size = 0x4, scoped, tag = 'scoped memory for tpu_custom_call.1']
    %16 = vsyncpa [#allocation3], 0
    // Predicated region
    $region2: #{tpu_custom_call.1} parent=1 // pred_check
      _
    $region3: #{tpu_custom_call.1} parent=1 // pred_check_branch
      %18 = sbr.rel (0) target = $region5
    $region4: #{tpu_custom_call.1} parent=1 // pred_region
      _
    $region5: #{tpu_custom_call.1} parent=1 // pred_fallthru
      _
    // Predicated region
    $region6: #{tpu_custom_call.1} parent=1 // pred_check
      _
    $region7: #{tpu_custom_call.1} parent=1 // pred_check_branch
      %20 = sbr.rel (0) target = $region9
    $region8: #{tpu_custom_call.1} parent=1 // pred_region
      _
    $region9: #{tpu_custom_call.1} parent=1 // pred_fallthru
      _
    // Predicated region
    $region10: #{tpu_custom_call.1} parent=1 // pred_check
      _
    $region11: #{tpu_custom_call.1} parent=1 // pred_check_branch
      %22 = sbr.rel (0) target = $region13
    $region12: #{tpu_custom_call.1} parent=1 // pred_region
      _
    $region13: #{tpu_custom_call.1} parent=1 // pred_fallthru
      _
    // Predicated region
    $region14: #{tpu_custom_call.1} parent=1 // pred_check
      _
    $region15: #{tpu_custom_call.1} parent=1 // pred_check_branch
      %24 = sbr.rel (0) target = $region17
    $region16: #{tpu_custom_call.1} parent=1 // pred_region
      _
    $region17: #{tpu_custom_call.1} parent=1 // pred_fallthru
      _
    // Predicated region
    $region18: #{tpu_custom_call.1} parent=1 // pred_check
      _
    $region19: #{tpu_custom_call.1} parent=1 // pred_check_branch
      %26 = sbr.rel (0) target = $region21
    $region20: #{tpu_custom_call.1} parent=1 // pred_region
      _
    $region21: #{tpu_custom_call.1} parent=1 // pred_fallthru
      _
    // Predicated region
    $region22: #{tpu_custom_call.1} parent=1 // pred_check
      _
    $region23: #{tpu_custom_call.1} parent=1 // pred_check_branch
      %28 = sbr.rel (0) target = $region25
    $region24: #{tpu_custom_call.1} parent=1 // pred_region
      _
    $region25: #{tpu_custom_call.1} parent=1 // pred_fallthru
      _
    // Predicated region
    $region26: #{tpu_custom_call.1} parent=1 // pred_check
      _
    $region27: #{tpu_custom_call.1} parent=1 // pred_check_branch
      %30 = sbr.rel (0) target = $region29
    $region28: #{tpu_custom_call.1} parent=1 // pred_region
      _
    $region29: #{tpu_custom_call.1} parent=1 // pred_fallthru
      _
    // Predicated region
    $region30: #{tpu_custom_call.1} parent=1 // pred_check
      _
    $region31: #{tpu_custom_call.1} parent=1 // pred_check_branch
      %32 = sbr.rel (0) target = $region33
    $region32: #{tpu_custom_call.1} parent=1 // pred_region
      _
    $region33: #{tpu_custom_call.1} parent=1 // pred_fallthru
      _
    // Predicated region
    $region34: #{tpu_custom_call.1} parent=1 // pred_check
      _
    $region35: #{tpu_custom_call.1} parent=1 // pred_check_branch
      %34 = sbr.rel (0) target = $region37
    $region36: #{tpu_custom_call.1} parent=1 // pred_region
      _
    $region37: #{tpu_custom_call.1} parent=1 // pred_fallthru
      _
    // Predicated region
    $region38: #{tpu_custom_call.1} parent=1 // pred_check
      _
    $region39: #{tpu_custom_call.1} parent=1 // pred_check_branch
      %36 = sbr.rel (0) target = $region41
    $region40: #{tpu_custom_call.1} parent=1 // pred_region
      _
    $region41: #{tpu_custom_call.1} parent=1 // pred_fallthru
      _
    // Predicated region
    $region42: #{tpu_custom_call.1} parent=1 // pred_check
      _
    $region43: #{tpu_custom_call.1} parent=1 // pred_check_branch
      %38 = sbr.rel (0) target = $region45
    $region44: #{tpu_custom_call.1} parent=1 // pred_region
      _
    $region45: #{tpu_custom_call.1} parent=1 // pred_fallthru
      _
    %v39 = vld [vmem:[%s0] sm:$0xff]
    %v40 = vld [vmem:[%s0 + $0x8] sm:$0xff]
    %v41 = vld [vmem:[%s0 + $0x10] sm:$0xff]
    %v42 = vld [vmem:[%s0 + $0x18] sm:$0xff]
    %v43 = vld [vmem:[%s1] sm:$0xff]
    %v44 = vld [vmem:[%s1 + $0x8] sm:$0xff]
    %v45 = vld [vmem:[%s1 + $0x10] sm:$0xff]
    %v46 = vld [vmem:[%s1 + $0x18] sm:$0xff]
    %vm47 = vcmp.gt.f32.partialorder %v43, 0.0
    %vm48 = vcmp.gt.f32.partialorder %v44, 0.0
    %vm49 = vcmp.gt.f32.partialorder %v45, 0.0
    %vm50 = vcmp.gt.f32.partialorder %v46, 0.0
    %v51 = vld [vmem:[%s2] sm:$0xff]
    %v52 = vld [vmem:[%s2 + $0x8] sm:$0xff]
    %vm53 = vcmask 130048
    %v55 = vsel %vm53, %v39, 0
    %v58 = vsel %vm53, %v40, 0
    %v61 = vsel %vm53, %v41, 0
    %v64 = vsel %vm53, %v42, 0
    %66 = vmatprep.subr.mxu0 0.0
    %67 = vmatpush1.msra.mxu0 %v51
    %68 = vmatprep.subr.mxu0 0.0
    %69 = vmatpush1.msra.mxu0 %v52
    %70 = vmatprep.subr.mxu0 0.0
    %71 = vmatpush1.msra.mxu0 0.0
    %72 = vmatprep.subr.mxu0 0.0
    %73 = vmatpush1.msra.mxu0 0.0
    %74 = vmatprep.subr.mxu0 0.0
    %75 = vmatpush1.msra.mxu0 0.0
    %76 = vmatprep.subr.mxu0 0.0
    %77 = vmatpush1.msra.mxu0 0.0
    %78 = vmatprep.subr.mxu0 0.0
    %79 = vmatpush1.msra.mxu0 0.0
    %80 = vmatprep.subr.mxu0 0.0
    %81 = vmatpush1.msra.mxu0 0.0
    %82 = vmatprep.subr.mxu0 0.0
    %83 = vmatpush1.msra.mxu0 0.0
    %84 = vmatprep.subr.mxu0 0.0
    %85 = vmatpush1.msra.mxu0 0.0
    %86 = vmatprep.subr.mxu0 0.0
    %87 = vmatpush1.msra.mxu0 0.0
    %88 = vmatprep.subr.mxu0 0.0
    %89 = vmatpush1.msra.mxu0 0.0
    %90 = vmatprep.subr.mxu0 0.0
    %91 = vmatpush1.msra.mxu0 0.0
    %92 = vmatprep.subr.mxu0 0.0
    %93 = vmatpush1.msra.mxu0 0.0
    %94 = vmatprep.subr.mxu0 0.0
    %95 = vmatpush1.msra.mxu0 0.0
    %96 = vmatprep.subr.mxu0 0.0
    %97 = vmatpush1.msra.mxu0 0.0
    %98 = vmatprep.subr.mxu0 0.0
    %99 = vmatpush1.msra.mxu0 0.0
    %100 = vmatprep.subr.mxu0 0.0
    %101 = vmatpush1.msra.mxu0 0.0
    %102 = vmatprep.subr.mxu0 0.0
    %103 = vmatpush1.msra.mxu0 0.0
    %104 = vmatprep.subr.mxu0 0.0
    %105 = vmatpush1.msra.mxu0 0.0
    %106 = vmatprep.subr.mxu0 0.0
    %107 = vmatpush1.msra.mxu0 0.0
    %108 = vmatprep.subr.mxu0 0.0
    %109 = vmatpush1.msra.mxu0 0.0
    %110 = vmatprep.subr.mxu0 0.0
    %111 = vmatpush1.msra.mxu0 0.0
    %112 = vmatprep.subr.mxu0 0.0
    %113 = vmatpush1.msra.mxu0 0.0
    %114 = vmatprep.subr.mxu0 0.0
    %115 = vmatpush1.msra.mxu0 0.0
    %116 = vmatprep.subr.mxu0 0.0
    %117 = vmatpush1.msra.mxu0 0.0
    %118 = vmatprep.subr.mxu0 0.0
    %119 = vmatpush1.msra.mxu0 0.0
    %120 = vmatprep.subr.mxu0 0.0
    %121 = vmatpush1.msra.mxu0 0.0
    %122 = vmatprep.subr.mxu0 0.0
    %123 = vmatpush1.msra.mxu0 0.0
    %124 = vmatprep.subr.mxu0 0.0
    %125 = vmatpush1.msra.mxu0 0.0
    %126 = vmatprep.subr.mxu0 0.0
    %127 = vmatpush1.msra.mxu0 0.0
    %128 = vmatprep.subr.mxu0 0.0
    %129 = vmatpush1.msra.mxu0 0.0
    %130 = vmatprep.mubr.f32.mxu0 0.0
    %131 = vmatmul.mubr.f32.gmra.mrb[0].mxu0 %v55
    %v132 = vpop.f32.mrb[0].mxu0
    %v133 = vadd.f32 0.0, %v132
    %v134 = vpop.f32.mrb[0].mxu0
    %135 = vmatprep.mubr.f32.mxu0 0.0
    %136 = vmatmul.mubr.f32.gmra.mrb[0].mxu0 %v58
    %v137 = vpop.f32.mrb[0].mxu0
    %v138 = vadd.f32 0.0, %v137
    %v139 = vpop.f32.mrb[0].mxu0
    %140 = vmatprep.mubr.f32.mxu0 0.0
    %141 = vmatmul.mubr.f32.gmra.mrb[0].mxu0 %v61
    %v142 = vpop.f32.mrb[0].mxu0
    %v143 = vadd.f32 0.0, %v142
    %v144 = vpop.f32.mrb[0].mxu0
    %145 = vmatprep.mubr.f32.mxu0 0.0
    %146 = vmatmul.mubr.f32.gmra.mrb[0].mxu0 %v64
    %v147 = vpop.f32.mrb[0].mxu0
    %v148 = vadd.f32 0.0, %v147
    %v149 = vpop.f32.mrb[0].mxu0
    %150 = vdwg.mxu0
    %v151 = vld [vmem:[%s3] sm:$0xff]
    %v152 = vld [vmem:[%s3 + $0x8] sm:$0xff]
    %v153 = vld [vmem:[%s3 + $0x10] sm:$0xff]
    %v154 = vld [vmem:[%s3 + $0x18] sm:$0xff]
    %vm155 = vcmask 261120
    %v157 = vsel %vm155, %v133, 0
    %v160 = vsel %vm155, %v138, 0
    %v163 = vsel %vm155, %v143, 0
    %v166 = vsel %vm155, %v148, 0
    %168 = vmatprep.subr.mxu0 0.0
    %169 = vmatpush1.msra.mxu0 %v151
    %170 = vmatprep.subr.mxu0 0.0
    %171 = vmatpush1.msra.mxu0 %v152
    %172 = vmatprep.subr.mxu0 0.0
    %173 = vmatpush1.msra.mxu0 %v153
    %174 = vmatprep.subr.mxu0 0.0
    %175 = vmatpush1.msra.mxu0 %v154
    %176 = vmatprep.subr.mxu0 0.0
    %177 = vmatpush1.msra.mxu0 0.0
    %178 = vmatprep.subr.mxu0 0.0
    %179 = vmatpush1.msra.mxu0 0.0
    %180 = vmatprep.subr.mxu0 0.0
    %181 = vmatpush1.msra.mxu0 0.0
    %182 = vmatprep.subr.mxu0 0.0
    %183 = vmatpush1.msra.mxu0 0.0
    %184 = vmatprep.subr.mxu0 0.0
    %185 = vmatpush1.msra.mxu0 0.0
    %186 = vmatprep.subr.mxu0 0.0
    %187 = vmatpush1.msra.mxu0 0.0
    %188 = vmatprep.subr.mxu0 0.0
    %189 = vmatpush1.msra.mxu0 0.0
    %190 = vmatprep.subr.mxu0 0.0
    %191 = vmatpush1.msra.mxu0 0.0
    %192 = vmatprep.subr.mxu0 0.0
    %193 = vmatpush1.msra.mxu0 0.0
    %194 = vmatprep.subr.mxu0 0.0
    %195 = vmatpush1.msra.mxu0 0.0
    %196 = vmatprep.subr.mxu0 0.0
    %197 = vmatpush1.msra.mxu0 0.0
    %198 = vmatprep.subr.mxu0 0.0
    %199 = vmatpush1.msra.mxu0 0.0
    %200 = vmatprep.subr.mxu0 0.0
    %201 = vmatpush1.msra.mxu0 0.0
    %202 = vmatprep.subr.mxu0 0.0
    %203 = vmatpush1.msra.mxu0 0.0
    %204 = vmatprep.subr.mxu0 0.0
    %205 = vmatpush1.msra.mxu0 0.0
    %206 = vmatprep.subr.mxu0 0.0
    %207 = vmatpush1.msra.mxu0 0.0
    %208 = vmatprep.subr.mxu0 0.0
    %209 = vmatpush1.msra.mxu0 0.0
    %210 = vmatprep.subr.mxu0 0.0
    %211 = vmatpush1.msra.mxu0 0.0
    %212 = vmatprep.subr.mxu0 0.0
    %213 = vmatpush1.msra.mxu0 0.0
    %214 = vmatprep.subr.mxu0 0.0
    %215 = vmatpush1.msra.mxu0 0.0
    %216 = vmatprep.subr.mxu0 0.0
    %217 = vmatpush1.msra.mxu0 0.0
    %218 = vmatprep.subr.mxu0 0.0
    %219 = vmatpush1.msra.mxu0 0.0
    %220 = vmatprep.subr.mxu0 0.0
    %221 = vmatpush1.msra.mxu0 0.0
    %222 = vmatprep.subr.mxu0 0.0
    %223 = vmatpush1.msra.mxu0 0.0
    %224 = vmatprep.subr.mxu0 0.0
    %225 = vmatpush1.msra.mxu0 0.0
    %226 = vmatprep.subr.mxu0 0.0
    %227 = vmatpush1.msra.mxu0 0.0
    %228 = vmatprep.subr.mxu0 0.0
    %229 = vmatpush1.msra.mxu0 0.0
    %230 = vmatprep.subr.mxu0 0.0
    %231 = vmatpush1.msra.mxu0 0.0
    %232 = vmatprep.mubr.f32.mxu0 0.0
    %233 = vmatmul.mubr.f32.gmra.mrb[0].mxu0 %v157
    %v234 = vpop.f32.mrb[0].mxu0
    %v235 = vadd.f32 0.0, %v234
    %v236 = vpop.f32.mrb[0].mxu0
    %237 = vmatprep.mubr.f32.mxu0 0.0
    %238 = vmatmul.mubr.f32.gmra.mrb[0].mxu0 %v160
    %v239 = vpop.f32.mrb[0].mxu0
    %v240 = vadd.f32 0.0, %v239
    %v241 = vpop.f32.mrb[0].mxu0
    %242 = vmatprep.mubr.f32.mxu0 0.0
    %243 = vmatmul.mubr.f32.gmra.mrb[0].mxu0 %v163
    %v244 = vpop.f32.mrb[0].mxu0
    %v245 = vadd.f32 0.0, %v244
    %v246 = vpop.f32.mrb[0].mxu0
    %247 = vmatprep.mubr.f32.mxu0 0.0
    %248 = vmatmul.mubr.f32.gmra.mrb[0].mxu0 %v166
    %v249 = vpop.f32.mrb[0].mxu0
    %v250 = vadd.f32 0.0, %v249
    %v251 = vpop.f32.mrb[0].mxu0
    %252 = vdwg.mxu0
    %v253 = vld [vmem:[%s4] sm:$0xff]
    %v254 = vld [vmem:[%s4 + $0x8] sm:$0xff]
    %v255 = vld [vmem:[%s4 + $0x10] sm:$0xff]
    %v256 = vld [vmem:[%s4 + $0x18] sm:$0xff]
    %257 = vmatprep.subr.mxu0 0.0
    %258 = vmatpush1.msra.mxu0 %v253
    %259 = vmatprep.subr.mxu0 0.0
    %260 = vmatpush1.msra.mxu0 %v254
    %261 = vmatprep.subr.mxu0 0.0
    %262 = vmatpush1.msra.mxu0 %v255
    %263 = vmatprep.subr.mxu0 0.0
    %264 = vmatpush1.msra.mxu0 %v256
    %265 = vmatprep.subr.mxu0 0.0
    %266 = vmatpush1.msra.mxu0 0.0
    %267 = vmatprep.subr.mxu0 0.0
    %268 = vmatpush1.msra.mxu0 0.0
    %269 = vmatprep.subr.mxu0 0.0
    %270 = vmatpush1.msra.mxu0 0.0
    %271 = vmatprep.subr.mxu0 0.0
    %272 = vmatpush1.msra.mxu0 0.0
    %273 = vmatprep.subr.mxu0 0.0
    %274 = vmatpush1.msra.mxu0 0.0
    %275 = vmatprep.subr.mxu0 0.0
    %276 = vmatpush1.msra.mxu0 0.0
    %277 = vmatprep.subr.mxu0 0.0
    %278 = vmatpush1.msra.mxu0 0.0
    %279 = vmatprep.subr.mxu0 0.0
    %280 = vmatpush1.msra.mxu0 0.0
    %281 = vmatprep.subr.mxu0 0.0
    %282 = vmatpush1.msra.mxu0 0.0
    %283 = vmatprep.subr.mxu0 0.0
    %284 = vmatpush1.msra.mxu0 0.0
    %285 = vmatprep.subr.mxu0 0.0
    %286 = vmatpush1.msra.mxu0 0.0
    %287 = vmatprep.subr.mxu0 0.0
    %288 = vmatpush1.msra.mxu0 0.0
    %289 = vmatprep.subr.mxu0 0.0
    %290 = vmatpush1.msra.mxu0 0.0
    %291 = vmatprep.subr.mxu0 0.0
    %292 = vmatpush1.msra.mxu0 0.0
    %293 = vmatprep.subr.mxu0 0.0
    %294 = vmatpush1.msra.mxu0 0.0
    %295 = vmatprep.subr.mxu0 0.0
    %296 = vmatpush1.msra.mxu0 0.0
    %297 = vmatprep.subr.mxu0 0.0
    %298 = vmatpush1.msra.mxu0 0.0
    %299 = vmatprep.subr.mxu0 0.0
    %300 = vmatpush1.msra.mxu0 0.0
    %301 = vmatprep.subr.mxu0 0.0
    %302 = vmatpush1.msra.mxu0 0.0
    %303 = vmatprep.subr.mxu0 0.0
    %304 = vmatpush1.msra.mxu0 0.0
    %305 = vmatprep.subr.mxu0 0.0
    %306 = vmatpush1.msra.mxu0 0.0
    %307 = vmatprep.subr.mxu0 0.0
    %308 = vmatpush1.msra.mxu0 0.0
    %309 = vmatprep.subr.mxu0 0.0
    %310 = vmatpush1.msra.mxu0 0.0
    %311 = vmatprep.subr.mxu0 0.0
    %312 = vmatpush1.msra.mxu0 0.0
    %313 = vmatprep.subr.mxu0 0.0
    %314 = vmatpush1.msra.mxu0 0.0
    %315 = vmatprep.subr.mxu0 0.0
    %316 = vmatpush1.msra.mxu0 0.0
    %317 = vmatprep.subr.mxu0 0.0
    %318 = vmatpush1.msra.mxu0 0.0
    %319 = vmatprep.subr.mxu0 0.0
    %320 = vmatpush1.msra.mxu0 0.0
    %321 = vmatprep.mubr.f32.mxu0 0.0
    %322 = vmatmul.mubr.f32.gmra.mrb[0].mxu0 %v157
    %v323 = vpop.f32.mrb[0].mxu0
    %v324 = vadd.f32 0.0, %v323
    %v325 = vpop.f32.mrb[0].mxu0
    %326 = vmatprep.mubr.f32.mxu0 0.0
    %327 = vmatmul.mubr.f32.gmra.mrb[0].mxu0 %v160
    %v328 = vpop.f32.mrb[0].mxu0
    %v329 = vadd.f32 0.0, %v328
    %v330 = vpop.f32.mrb[0].mxu0
    %331 = vmatprep.mubr.f32.mxu0 0.0
    %332 = vmatmul.mubr.f32.gmra.mrb[0].mxu0 %v163
    %v333 = vpop.f32.mrb[0].mxu0
    %v334 = vadd.f32 0.0, %v333
    %v335 = vpop.f32.mrb[0].mxu0
    %336 = vmatprep.mubr.f32.mxu0 0.0
    %337 = vmatmul.mubr.f32.gmra.mrb[0].mxu0 %v166
    %v338 = vpop.f32.mrb[0].mxu0
    %v339 = vadd.f32 0.0, %v338
    %v340 = vpop.f32.mrb[0].mxu0
    %341 = vdwg.mxu0
    %342 = vxpose.xlu0.b32.start [1/16] %v235, 128
    %343 = vxpose.xlu0.b32.cont [2/16] %v240, 128
    %344 = vxpose.xlu0.b32.cont [3/16] %v245, 128
    %345 = vxpose.xlu0.b32.cont [4/16] %v250, 128
    %346 = vxpose.xlu0.b32.cont [5/16] 0.0, 128
    %347 = vxpose.xlu0.b32.cont [6/16] 0.0, 128
    %348 = vxpose.xlu0.b32.cont [7/16] 0.0, 128
    %349 = vxpose.xlu0.b32.cont [8/16] 0.0, 128
    %350 = vxpose.xlu0.b32.cont [9/16] 0.0, 128
    %351 = vxpose.xlu0.b32.cont [10/16] 0.0, 128
    %352 = vxpose.xlu0.b32.cont [11/16] 0.0, 128
    %353 = vxpose.xlu0.b32.cont [12/16] 0.0, 128
    %354 = vxpose.xlu0.b32.cont [13/16] 0.0, 128
    %355 = vxpose.xlu0.b32.cont [14/16] 0.0, 128
    %356 = vxpose.xlu0.b32.cont [15/16] 0.0, 128
    %357 = vxpose.xlu0.b32.end [16/16] 0.0, 128
    %v358 = vpop.trf.xlu0
    %v359 = vpop.trf.xlu0
    %v360 = vpop.trf.xlu0
    %v361 = vpop.trf.xlu0
    %v362 = vpop.trf.xlu0
    %v363 = vpop.trf.xlu0
    %v364 = vpop.trf.xlu0
    %v365 = vpop.trf.xlu0
    %v366 = vpop.trf.xlu0
    %v367 = vpop.trf.xlu0
    %v368 = vpop.trf.xlu0
    %v369 = vpop.trf.xlu0
    %v370 = vpop.trf.xlu0
    %v371 = vpop.trf.xlu0
    %v372 = vpop.trf.xlu0
    %v373 = vpop.trf.xlu0
    %375 = vset.pattern.permute.xlu0 0
    %376 = vperm.xlu0 %375, %v324
    %v377 = vpop.permute.xlu0 %376
    %380 = vset.pattern.permute.xlu0 0
    %381 = vperm.xlu0 %380, %v329
    %v382 = vpop.permute.xlu0 %381
    %385 = vset.pattern.permute.xlu0 0
    %386 = vperm.xlu0 %385, %v334
    %v387 = vpop.permute.xlu0 %386
    %390 = vset.pattern.permute.xlu0 0
    %391 = vperm.xlu0 %390, %v339
    %v392 = vpop.permute.xlu0 %391
    %v394 = vlaneseq
    %v395 = vshrl.u32 %v394, 7
    %v396 = vsub.s32 0, %v395
    %v397 = vrot.slane %v358, %v396
    %v398 = vadd.f32 %v377, %v397
    %v399 = vadd.f32 %v382, %v397
    %v400 = vadd.f32 %v387, %v397
    %v401 = vadd.f32 %v392, %v397
    %vm402 = vcmp.gt.f32.partialorder %v398, 0.0
    %vm403 = vcmp.gt.f32.partialorder %v399, 0.0
    %vm404 = vcmp.gt.f32.partialorder %v400, 0.0
    %vm405 = vcmp.gt.f32.partialorder %v401, 0.0
    %v406 = vmul.f32 %v398, 0.2
    %v407 = vmul.f32 %v399, 0.2
    %v408 = vmul.f32 %v400, 0.2
    %v409 = vmul.f32 %v401, 0.2
    %v410 = vsel %vm402, %v398, %v406
    %v411 = vsel %vm403, %v399, %v407
    %v412 = vsel %vm404, %v400, %v408
    %v413 = vsel %vm405, %v401, %v409
    %v414 = vsel %vm47, %v410, -1e+30
    %v415 = vsel %vm48, %v411, -1e+30
    %v416 = vsel %vm49, %v412, -1e+30
    %v417 = vsel %vm50, %v413, -1e+30
    %v418 = vsel %vm155, %v414, -inf
    %419 = vmax.xlane.f32.xlu0 %v418
    %v420 = vpop.xlane.xlu0 %419
    %v421 = vsel %vm155, %v415, -inf
    %422 = vmax.xlane.f32.xlu0 %v421
    %v423 = vpop.xlane.xlu0 %422
    %v424 = vsel %vm155, %v416, -inf
    %425 = vmax.xlane.f32.xlu0 %v424
    %v426 = vpop.xlane.xlu0 %425
    %v427 = vsel %vm155, %v417, -inf
    %428 = vmax.xlane.f32.xlu0 %v427
    %v429 = vpop.xlane.xlu0 %428
    %v430 = vsub.f32 %v414, %v420
    %v431 = vsub.f32 %v415, %v423
    %v432 = vsub.f32 %v416, %v426
    %v433 = vsub.f32 %v417, %v429
    %v434 = vmul.f32 %v430, 1.442695
    %v435 = vpow.pop %v434
    %v436 = vmul.f32 %v431, 1.442695
    %v437 = vpow.pop %v436
    %v438 = vmul.f32 %v432, 1.442695
    %v439 = vpow.pop %v438
    %v440 = vmul.f32 %v433, 1.442695
    %v441 = vpow.pop %v440
    %v442 = vsel %vm155, %v435, 0.0
    %443 = vadd.xlane.f32.xlu0 %v442
    %v444 = vpop.xlane.xlu0 %443
    %v445 = vsel %vm155, %v437, 0.0
    %446 = vadd.xlane.f32.xlu0 %v445
    %v447 = vpop.xlane.xlu0 %446
    %v448 = vsel %vm155, %v439, 0.0
    %449 = vadd.xlane.f32.xlu0 %v448
    %v450 = vpop.xlane.xlu0 %449
    %v451 = vsel %vm155, %v441, 0.0
    %452 = vadd.xlane.f32.xlu0 %v451
    %v453 = vpop.xlane.xlu0 %452
    %v454 = vrcp.pop %v444
    %v455 = vrcp.pop %v447
    %v456 = vrcp.pop %v450
    %v457 = vrcp.pop %v453
    %v458 = vmul.f32 %v435, %v454
    %v459 = vmul.f32 %v437, %v455
    %v460 = vmul.f32 %v439, %v456
    %v461 = vmul.f32 %v441, %v457
    %462 = vset.pattern.permute.xlu0 1
    %463 = vperm.xlu0 %462, %v324
    %v464 = vpop.permute.xlu0 %463
    %466 = vset.pattern.permute.xlu0 1
    %467 = vperm.xlu0 %466, %v329
    %v468 = vpop.permute.xlu0 %467
    %470 = vset.pattern.permute.xlu0 1
    %471 = vperm.xlu0 %470, %v334
    %v472 = vpop.permute.xlu0 %471
    %474 = vset.pattern.permute.xlu0 1
    %475 = vperm.xlu0 %474, %v339
    %v476 = vpop.permute.xlu0 %475
    %v478 = vlaneseq
    %v479 = vshrl.u32 %v478, 7
    %v480 = vsub.s32 1, %v479
    %v481 = vrot.slane %v358, %v480
    %v482 = vadd.f32 %v464, %v481
    %v483 = vadd.f32 %v468, %v481
    %v484 = vadd.f32 %v472, %v481
    %v485 = vadd.f32 %v476, %v481
    %vm486 = vcmp.gt.f32.partialorder %v482, 0.0
    %vm487 = vcmp.gt.f32.partialorder %v483, 0.0
    %vm488 = vcmp.gt.f32.partialorder %v484, 0.0
    %vm489 = vcmp.gt.f32.partialorder %v485, 0.0
    %v490 = vmul.f32 %v482, 0.2
    %v491 = vmul.f32 %v483, 0.2
    %v492 = vmul.f32 %v484, 0.2
    %v493 = vmul.f32 %v485, 0.2
    %v494 = vsel %vm486, %v482, %v490
    %v495 = vsel %vm487, %v483, %v491
    %v496 = vsel %vm488, %v484, %v492
    %v497 = vsel %vm489, %v485, %v493
    %v498 = vsel %vm47, %v494, -1e+30
    %v499 = vsel %vm48, %v495, -1e+30
    %v500 = vsel %vm49, %v496, -1e+30
    %v501 = vsel %vm50, %v497, -1e+30
    %v502 = vsel %vm155, %v498, -inf
    %503 = vmax.xlane.f32.xlu0 %v502
    %v504 = vpop.xlane.xlu0 %503
    %v505 = vsel %vm155, %v499, -inf
    %506 = vmax.xlane.f32.xlu0 %v505
    %v507 = vpop.xlane.xlu0 %506
    %v508 = vsel %vm155, %v500, -inf
    %509 = vmax.xlane.f32.xlu0 %v508
    %v510 = vpop.xlane.xlu0 %509
    %v511 = vsel %vm155, %v501, -inf
    %512 = vmax.xlane.f32.xlu0 %v511
    %v513 = vpop.xlane.xlu0 %512
    %v514 = vsub.f32 %v498, %v504
    %v515 = vsub.f32 %v499, %v507
    %v516 = vsub.f32 %v500, %v510
    %v517 = vsub.f32 %v501, %v513
    %v518 = vmul.f32 %v514, 1.442695
    %v519 = vpow.pop %v518
    %v520 = vmul.f32 %v515, 1.442695
    %v521 = vpow.pop %v520
    %v522 = vmul.f32 %v516, 1.442695
    %v523 = vpow.pop %v522
    %v524 = vmul.f32 %v517, 1.442695
    %v525 = vpow.pop %v524
    %v526 = vsel %vm155, %v519, 0.0
    %527 = vadd.xlane.f32.xlu0 %v526
    %v528 = vpop.xlane.xlu0 %527
    %v529 = vsel %vm155, %v521, 0.0
    %530 = vadd.xlane.f32.xlu0 %v529
    %v531 = vpop.xlane.xlu0 %530
    %v532 = vsel %vm155, %v523, 0.0
    %533 = vadd.xlane.f32.xlu0 %v532
    %v534 = vpop.xlane.xlu0 %533
    %v535 = vsel %vm155, %v525, 0.0
    %536 = vadd.xlane.f32.xlu0 %v535
    %v537 = vpop.xlane.xlu0 %536
    %v538 = vrcp.pop %v528
    %v539 = vrcp.pop %v531
    %v540 = vrcp.pop %v534
    %v541 = vrcp.pop %v537
    %v542 = vmul.f32 %v519, %v538
    %v543 = vmul.f32 %v521, %v539
    %v544 = vmul.f32 %v523, %v540
    %v545 = vmul.f32 %v525, %v541
    %546 = vset.pattern.permute.xlu0 2
    %547 = vperm.xlu0 %546, %v324
    %v548 = vpop.permute.xlu0 %547
    %550 = vset.pattern.permute.xlu0 2
    %551 = vperm.xlu0 %550, %v329
    %v552 = vpop.permute.xlu0 %551
    %554 = vset.pattern.permute.xlu0 2
    %555 = vperm.xlu0 %554, %v334
    %v556 = vpop.permute.xlu0 %555
    %558 = vset.pattern.permute.xlu0 2
    %559 = vperm.xlu0 %558, %v339
    %v560 = vpop.permute.xlu0 %559
    %v562 = vlaneseq
    %v563 = vshrl.u32 %v562, 7
    %v564 = vsub.s32 2, %v563
    %v565 = vrot.slane %v358, %v564
    %v566 = vadd.f32 %v548, %v565
    %v567 = vadd.f32 %v552, %v565
    %v568 = vadd.f32 %v556, %v565
    %v569 = vadd.f32 %v560, %v565
    %vm570 = vcmp.gt.f32.partialorder %v566, 0.0
    %vm571 = vcmp.gt.f32.partialorder %v567, 0.0
    %vm572 = vcmp.gt.f32.partialorder %v568, 0.0
    %vm573 = vcmp.gt.f32.partialorder %v569, 0.0
    %v574 = vmul.f32 %v566, 0.2
    %v575 = vmul.f32 %v567, 0.2
    %v576 = vmul.f32 %v568, 0.2
    %v577 = vmul.f32 %v569, 0.2
    %v578 = vsel %vm570, %v566, %v574
    %v579 = vsel %vm571, %v567, %v575
    %v580 = vsel %vm572, %v568, %v576
    %v581 = vsel %vm573, %v569, %v577
    %v582 = vsel %vm47, %v578, -1e+30
    %v583 = vsel %vm48, %v579, -1e+30
    %v584 = vsel %vm49, %v580, -1e+30
    %v585 = vsel %vm50, %v581, -1e+30
    %v586 = vsel %vm155, %v582, -inf
    %587 = vmax.xlane.f32.xlu0 %v586
    %v588 = vpop.xlane.xlu0 %587
    %v589 = vsel %vm155, %v583, -inf
    %590 = vmax.xlane.f32.xlu0 %v589
    %v591 = vpop.xlane.xlu0 %590
    %v592 = vsel %vm155, %v584, -inf
    %593 = vmax.xlane.f32.xlu0 %v592
    %v594 = vpop.xlane.xlu0 %593
    %v595 = vsel %vm155, %v585, -inf
    %596 = vmax.xlane.f32.xlu0 %v595
    %v597 = vpop.xlane.xlu0 %596
    %v598 = vsub.f32 %v582, %v588
    %v599 = vsub.f32 %v583, %v591
    %v600 = vsub.f32 %v584, %v594
    %v601 = vsub.f32 %v585, %v597
    %v602 = vmul.f32 %v598, 1.442695
    %v603 = vpow.pop %v602
    %v604 = vmul.f32 %v599, 1.442695
    %v605 = vpow.pop %v604
    %v606 = vmul.f32 %v600, 1.442695
    %v607 = vpow.pop %v606
    %v608 = vmul.f32 %v601, 1.442695
    %v609 = vpow.pop %v608
    %v610 = vsel %vm155, %v603, 0.0
    %611 = vadd.xlane.f32.xlu0 %v610
    %v612 = vpop.xlane.xlu0 %611
    %v613 = vsel %vm155, %v605, 0.0
    %614 = vadd.xlane.f32.xlu0 %v613
    %v615 = vpop.xlane.xlu0 %614
    %v616 = vsel %vm155, %v607, 0.0
    %617 = vadd.xlane.f32.xlu0 %v616
    %v618 = vpop.xlane.xlu0 %617
    %v619 = vsel %vm155, %v609, 0.0
    %620 = vadd.xlane.f32.xlu0 %v619
    %v621 = vpop.xlane.xlu0 %620
    %v622 = vrcp.pop %v612
    %v623 = vrcp.pop %v615
    %v624 = vrcp.pop %v618
    %v625 = vrcp.pop %v621
    %v626 = vmul.f32 %v603, %v622
    %v627 = vmul.f32 %v605, %v623
    %v628 = vmul.f32 %v607, %v624
    %v629 = vmul.f32 %v609, %v625
    %630 = vset.pattern.permute.xlu0 3
    %631 = vperm.xlu0 %630, %v324
    %v632 = vpop.permute.xlu0 %631
    %634 = vset.pattern.permute.xlu0 3
    %635 = vperm.xlu0 %634, %v329
    %v636 = vpop.permute.xlu0 %635
    %638 = vset.pattern.permute.xlu0 3
    %639 = vperm.xlu0 %638, %v334
    %v640 = vpop.permute.xlu0 %639
    %642 = vset.pattern.permute.xlu0 3
    %643 = vperm.xlu0 %642, %v339
    %v644 = vpop.permute.xlu0 %643
    %v646 = vlaneseq
    %v647 = vshrl.u32 %v646, 7
    %v648 = vsub.s32 3, %v647
    %v649 = vrot.slane %v358, %v648
    %v650 = vadd.f32 %v632, %v649
    %v651 = vadd.f32 %v636, %v649
    %v652 = vadd.f32 %v640, %v649
    %v653 = vadd.f32 %v644, %v649
    %vm654 = vcmp.gt.f32.partialorder %v650, 0.0
    %vm655 = vcmp.gt.f32.partialorder %v651, 0.0
    %vm656 = vcmp.gt.f32.partialorder %v652, 0.0
    %vm657 = vcmp.gt.f32.partialorder %v653, 0.0
    %v658 = vmul.f32 %v650, 0.2
    %v659 = vmul.f32 %v651, 0.2
    %v660 = vmul.f32 %v652, 0.2
    %v661 = vmul.f32 %v653, 0.2
    %v662 = vsel %vm654, %v650, %v658
    %v663 = vsel %vm655, %v651, %v659
    %v664 = vsel %vm656, %v652, %v660
    %v665 = vsel %vm657, %v653, %v661
    %v666 = vsel %vm47, %v662, -1e+30
    %v667 = vsel %vm48, %v663, -1e+30
    %v668 = vsel %vm49, %v664, -1e+30
    %v669 = vsel %vm50, %v665, -1e+30
    %v670 = vsel %vm155, %v666, -inf
    %671 = vmax.xlane.f32.xlu0 %v670
    %v672 = vpop.xlane.xlu0 %671
    %v673 = vsel %vm155, %v667, -inf
    %674 = vmax.xlane.f32.xlu0 %v673
    %v675 = vpop.xlane.xlu0 %674
    %v676 = vsel %vm155, %v668, -inf
    %677 = vmax.xlane.f32.xlu0 %v676
    %v678 = vpop.xlane.xlu0 %677
    %v679 = vsel %vm155, %v669, -inf
    %680 = vmax.xlane.f32.xlu0 %v679
    %v681 = vpop.xlane.xlu0 %680
    %v682 = vsub.f32 %v666, %v672
    %v683 = vsub.f32 %v667, %v675
    %v684 = vsub.f32 %v668, %v678
    %v685 = vsub.f32 %v669, %v681
    %v686 = vmul.f32 %v682, 1.442695
    %v687 = vpow.pop %v686
    %v688 = vmul.f32 %v683, 1.442695
    %v689 = vpow.pop %v688
    %v690 = vmul.f32 %v684, 1.442695
    %v691 = vpow.pop %v690
    %v692 = vmul.f32 %v685, 1.442695
    %v693 = vpow.pop %v692
    %v694 = vsel %vm155, %v687, 0.0
    %695 = vadd.xlane.f32.xlu0 %v694
    %v696 = vpop.xlane.xlu0 %695
    %v697 = vsel %vm155, %v689, 0.0
    %698 = vadd.xlane.f32.xlu0 %v697
    %v699 = vpop.xlane.xlu0 %698
    %v700 = vsel %vm155, %v691, 0.0
    %701 = vadd.xlane.f32.xlu0 %v700
    %v702 = vpop.xlane.xlu0 %701
    %v703 = vsel %vm155, %v693, 0.0
    %704 = vadd.xlane.f32.xlu0 %v703
    %v705 = vpop.xlane.xlu0 %704
    %v706 = vrcp.pop %v696
    %v707 = vrcp.pop %v699
    %v708 = vrcp.pop %v702
    %v709 = vrcp.pop %v705
    %v710 = vmul.f32 %v687, %v706
    %v711 = vmul.f32 %v689, %v707
    %v712 = vmul.f32 %v691, %v708
    %v713 = vmul.f32 %v693, %v709
    %718 = vrot.lane.b32.xlu0 %v542, 32
    %v719 = vpop.permute.xlu0 %718
    %720 = vrot.lane.b32.xlu0 %v543, 32
    %v721 = vpop.permute.xlu0 %720
    %722 = vrot.lane.b32.xlu0 %v544, 32
    %v723 = vpop.permute.xlu0 %722
    %724 = vrot.lane.b32.xlu0 %v545, 32
    %v725 = vpop.permute.xlu0 %724
    %734 = vrot.lane.b32.xlu0 %v626, 64
    %v735 = vpop.permute.xlu0 %734
    %736 = vrot.lane.b32.xlu0 %v627, 64
    %v737 = vpop.permute.xlu0 %736
    %738 = vrot.lane.b32.xlu0 %v628, 64
    %v739 = vpop.permute.xlu0 %738
    %740 = vrot.lane.b32.xlu0 %v629, 64
    %v741 = vpop.permute.xlu0 %740
    %750 = vrot.lane.b32.xlu0 %v710, 96
    %v751 = vpop.permute.xlu0 %750
    %752 = vrot.lane.b32.xlu0 %v711, 96
    %v753 = vpop.permute.xlu0 %752
    %754 = vrot.lane.b32.xlu0 %v712, 96
    %v755 = vpop.permute.xlu0 %754
    %756 = vrot.lane.b32.xlu0 %v713, 96
    %v757 = vpop.permute.xlu0 %756
    %v762 = vsel %vm155, %v458, %v719
    %v763 = vsel %vm155, %v459, %v721
    %v764 = vsel %vm155, %v460, %v723
    %v765 = vsel %vm155, %v461, %v725
    %vm766 = vcmask 523264
    %v767 = vsel %vm766, %v762, %v735
    %v768 = vsel %vm766, %v763, %v737
    %v769 = vsel %vm766, %v764, %v739
    %v770 = vsel %vm766, %v765, %v741
    %vm771 = vcmask 785408
    %v772 = vsel %vm771, %v767, %v751
    %v773 = vsel %vm771, %v768, %v753
    %v774 = vsel %vm771, %v769, %v755
    %v775 = vsel %vm771, %v770, %v757
    %v776 = vld [vmem:[%s5] sm:$0xf]
    %v777 = vlaneseq
    %v778 = vshrl.u32 %v777, 7
    %v779 = vsub.s32 0, %v778
    %v780 = vrot.slane %v776, %v779
    %v781 = vmul.f32 %v133, %v780
    %v782 = vmul.f32 %v138, %v780
    %v783 = vmul.f32 %v143, %v780
    %v784 = vmul.f32 %v148, %v780
    %v785 = vlaneseq
    %v786 = vshrl.u32 %v785, 7
    %v787 = vsub.s32 1, %v786
    %v788 = vrot.slane %v776, %v787
    %v789 = vmul.f32 %v133, %v788
    %v790 = vmul.f32 %v138, %v788
    %v791 = vmul.f32 %v143, %v788
    %v792 = vmul.f32 %v148, %v788
    %v793 = vlaneseq
    %v794 = vshrl.u32 %v793, 7
    %v795 = vsub.s32 2, %v794
    %v796 = vrot.slane %v776, %v795
    %v797 = vmul.f32 %v133, %v796
    %v798 = vmul.f32 %v138, %v796
    %v799 = vmul.f32 %v143, %v796
    %v800 = vmul.f32 %v148, %v796
    %v801 = vlaneseq
    %v802 = vshrl.u32 %v801, 7
    %v803 = vsub.s32 3, %v802
    %v804 = vrot.slane %v776, %v803
    %v805 = vmul.f32 %v133, %v804
    %v806 = vmul.f32 %v138, %v804
    %v807 = vmul.f32 %v143, %v804
    %v808 = vmul.f32 %v148, %v804
    %v809 = vld [vmem:[%s6] sm:$0x1]
    %v811 = vlaneseq
    %v812 = vshrl.u32 %v811, 7
    %v813 = vsub.s32 0, %v812
    %v814 = vrot.slane %v809, %v813
    %816 = vmatprep.subr.mxu0 0.0
    %817 = vmatpush1.msra.mxu0 %v781
    %818 = vmatprep.subr.mxu0 0.0
    %819 = vmatpush1.msra.mxu0 %v782
    %820 = vmatprep.subr.mxu0 0.0
    %821 = vmatpush1.msra.mxu0 %v783
    %822 = vmatprep.subr.mxu0 0.0
    %823 = vmatpush1.msra.mxu0 %v784
    %824 = vmatprep.subr.mxu0 0.0
    %825 = vmatpush1.msra.mxu0 %v789
    %826 = vmatprep.subr.mxu0 0.0
    %827 = vmatpush1.msra.mxu0 %v790
    %828 = vmatprep.subr.mxu0 0.0
    %829 = vmatpush1.msra.mxu0 %v791
    %830 = vmatprep.subr.mxu0 0.0
    %831 = vmatpush1.msra.mxu0 %v792
    %832 = vmatprep.subr.mxu0 0.0
    %833 = vmatpush1.msra.mxu0 %v797
    %834 = vmatprep.subr.mxu0 0.0
    %835 = vmatpush1.msra.mxu0 %v798
    %836 = vmatprep.subr.mxu0 0.0
    %837 = vmatpush1.msra.mxu0 %v799
    %838 = vmatprep.subr.mxu0 0.0
    %839 = vmatpush1.msra.mxu0 %v800
    %840 = vmatprep.subr.mxu0 0.0
    %841 = vmatpush1.msra.mxu0 %v805
    %842 = vmatprep.subr.mxu0 0.0
    %843 = vmatpush1.msra.mxu0 %v806
    %844 = vmatprep.subr.mxu0 0.0
    %845 = vmatpush1.msra.mxu0 %v807
    %846 = vmatprep.subr.mxu0 0.0
    %847 = vmatpush1.msra.mxu0 %v808
    %848 = vmatprep.subr.mxu0 0.0
    %849 = vmatpush1.msra.mxu0 0.0
    %850 = vmatprep.subr.mxu0 0.0
    %851 = vmatpush1.msra.mxu0 0.0
    %852 = vmatprep.subr.mxu0 0.0
    %853 = vmatpush1.msra.mxu0 0.0
    %854 = vmatprep.subr.mxu0 0.0
    %855 = vmatpush1.msra.mxu0 0.0
    %856 = vmatprep.subr.mxu0 0.0
    %857 = vmatpush1.msra.mxu0 0.0
    %858 = vmatprep.subr.mxu0 0.0
    %859 = vmatpush1.msra.mxu0 0.0
    %860 = vmatprep.subr.mxu0 0.0
    %861 = vmatpush1.msra.mxu0 0.0
    %862 = vmatprep.subr.mxu0 0.0
    %863 = vmatpush1.msra.mxu0 0.0
    %864 = vmatprep.subr.mxu0 0.0
    %865 = vmatpush1.msra.mxu0 0.0
    %866 = vmatprep.subr.mxu0 0.0
    %867 = vmatpush1.msra.mxu0 0.0
    %868 = vmatprep.subr.mxu0 0.0
    %869 = vmatpush1.msra.mxu0 0.0
    %870 = vmatprep.subr.mxu0 0.0
    %871 = vmatpush1.msra.mxu0 0.0
    %872 = vmatprep.subr.mxu0 0.0
    %873 = vmatpush1.msra.mxu0 0.0
    %874 = vmatprep.subr.mxu0 0.0
    %875 = vmatpush1.msra.mxu0 0.0
    %876 = vmatprep.subr.mxu0 0.0
    %877 = vmatpush1.msra.mxu0 0.0
    %878 = vmatprep.subr.mxu0 0.0
    %879 = vmatpush1.msra.mxu0 0.0
    %880 = vmatprep.mubr.f32.mxu0 0.0
    %881 = vmatmul.mubr.f32.gmra.mrb[0].mxu0 %v772
    %v882 = vpop.f32.mrb[0].mxu0
    %v883 = vadd.f32 %v814, %v882
    %v884 = vpop.f32.mrb[0].mxu0
    %885 = vmatprep.mubr.f32.mxu0 0.0
    %886 = vmatmul.mubr.f32.gmra.mrb[0].mxu0 %v773
    %v887 = vpop.f32.mrb[0].mxu0
    %v888 = vadd.f32 %v814, %v887
    %v889 = vpop.f32.mrb[0].mxu0
    %890 = vmatprep.mubr.f32.mxu0 0.0
    %891 = vmatmul.mubr.f32.gmra.mrb[0].mxu0 %v774
    %v892 = vpop.f32.mrb[0].mxu0
    %v893 = vadd.f32 %v814, %v892
    %v894 = vpop.f32.mrb[0].mxu0
    %895 = vmatprep.mubr.f32.mxu0 0.0
    %896 = vmatmul.mubr.f32.gmra.mrb[0].mxu0 %v775
    %v897 = vpop.f32.mrb[0].mxu0
    %v898 = vadd.f32 %v814, %v897
    %v899 = vpop.f32.mrb[0].mxu0
    %900 = vdwg.mxu0
    %v901 = vmax.f32 %v883, 0.0
    %v902 = vmax.f32 %v888, 0.0
    %v903 = vmax.f32 %v893, 0.0
    %v904 = vmax.f32 %v898, 0.0
    %v905 = vld [vmem:[%s7] sm:$0xff]
    %v906 = vld [vmem:[%s7 + $0x8] sm:$0xff]
    %v907 = vld [vmem:[%s7 + $0x10] sm:$0xff]
    %v908 = vld [vmem:[%s7 + $0x18] sm:$0xff]
    %v910 = vsel %vm155, %v901, 0
    %v913 = vsel %vm155, %v902, 0
    %v916 = vsel %vm155, %v903, 0
    %v919 = vsel %vm155, %v904, 0
    %921 = vmatprep.subr.mxu0 0.0
    %922 = vmatpush1.msra.mxu0 %v905
    %923 = vmatprep.subr.mxu0 0.0
    %924 = vmatpush1.msra.mxu0 %v906
    %925 = vmatprep.subr.mxu0 0.0
    %926 = vmatpush1.msra.mxu0 %v907
    %927 = vmatprep.subr.mxu0 0.0
    %928 = vmatpush1.msra.mxu0 %v908
    %929 = vmatprep.subr.mxu0 0.0
    %930 = vmatpush1.msra.mxu0 0.0
    %931 = vmatprep.subr.mxu0 0.0
    %932 = vmatpush1.msra.mxu0 0.0
    %933 = vmatprep.subr.mxu0 0.0
    %934 = vmatpush1.msra.mxu0 0.0
    %935 = vmatprep.subr.mxu0 0.0
    %936 = vmatpush1.msra.mxu0 0.0
    %937 = vmatprep.subr.mxu0 0.0
    %938 = vmatpush1.msra.mxu0 0.0
    %939 = vmatprep.subr.mxu0 0.0
    %940 = vmatpush1.msra.mxu0 0.0
    %941 = vmatprep.subr.mxu0 0.0
    %942 = vmatpush1.msra.mxu0 0.0
    %943 = vmatprep.subr.mxu0 0.0
    %944 = vmatpush1.msra.mxu0 0.0
    %945 = vmatprep.subr.mxu0 0.0
    %946 = vmatpush1.msra.mxu0 0.0
    %947 = vmatprep.subr.mxu0 0.0
    %948 = vmatpush1.msra.mxu0 0.0
    %949 = vmatprep.subr.mxu0 0.0
    %950 = vmatpush1.msra.mxu0 0.0
    %951 = vmatprep.subr.mxu0 0.0
    %952 = vmatpush1.msra.mxu0 0.0
    %953 = vmatprep.subr.mxu0 0.0
    %954 = vmatpush1.msra.mxu0 0.0
    %955 = vmatprep.subr.mxu0 0.0
    %956 = vmatpush1.msra.mxu0 0.0
    %957 = vmatprep.subr.mxu0 0.0
    %958 = vmatpush1.msra.mxu0 0.0
    %959 = vmatprep.subr.mxu0 0.0
    %960 = vmatpush1.msra.mxu0 0.0
    %961 = vmatprep.subr.mxu0 0.0
    %962 = vmatpush1.msra.mxu0 0.0
    %963 = vmatprep.subr.mxu0 0.0
    %964 = vmatpush1.msra.mxu0 0.0
    %965 = vmatprep.subr.mxu0 0.0
    %966 = vmatpush1.msra.mxu0 0.0
    %967 = vmatprep.subr.mxu0 0.0
    %968 = vmatpush1.msra.mxu0 0.0
    %969 = vmatprep.subr.mxu0 0.0
    %970 = vmatpush1.msra.mxu0 0.0
    %971 = vmatprep.subr.mxu0 0.0
    %972 = vmatpush1.msra.mxu0 0.0
    %973 = vmatprep.subr.mxu0 0.0
    %974 = vmatpush1.msra.mxu0 0.0
    %975 = vmatprep.subr.mxu0 0.0
    %976 = vmatpush1.msra.mxu0 0.0
    %977 = vmatprep.subr.mxu0 0.0
    %978 = vmatpush1.msra.mxu0 0.0
    %979 = vmatprep.subr.mxu0 0.0
    %980 = vmatpush1.msra.mxu0 0.0
    %981 = vmatprep.subr.mxu0 0.0
    %982 = vmatpush1.msra.mxu0 0.0
    %983 = vmatprep.subr.mxu0 0.0
    %984 = vmatpush1.msra.mxu0 0.0
    %985 = vmatprep.mubr.f32.mxu0 0.0
    %986 = vmatmul.mubr.f32.gmra.mrb[0].mxu0 %v910
    %v987 = vpop.f32.mrb[0].mxu0
    %v988 = vadd.f32 0.0, %v987
    %v989 = vpop.f32.mrb[0].mxu0
    %990 = vmatprep.mubr.f32.mxu0 0.0
    %991 = vmatmul.mubr.f32.gmra.mrb[0].mxu0 %v913
    %v992 = vpop.f32.mrb[0].mxu0
    %v993 = vadd.f32 0.0, %v992
    %v994 = vpop.f32.mrb[0].mxu0
    %995 = vmatprep.mubr.f32.mxu0 0.0
    %996 = vmatmul.mubr.f32.gmra.mrb[0].mxu0 %v916
    %v997 = vpop.f32.mrb[0].mxu0
    %v998 = vadd.f32 0.0, %v997
    %v999 = vpop.f32.mrb[0].mxu0
    %1000 = vmatprep.mubr.f32.mxu0 0.0
    %1001 = vmatmul.mubr.f32.gmra.mrb[0].mxu0 %v919
    %v1002 = vpop.f32.mrb[0].mxu0
    %v1003 = vadd.f32 0.0, %v1002
    %v1004 = vpop.f32.mrb[0].mxu0
    %1005 = vdwg.mxu0
    %v1006 = vld [vmem:[%s8] sm:$0xff]
    %v1007 = vld [vmem:[%s8 + $0x8] sm:$0xff]
    %v1008 = vld [vmem:[%s8 + $0x10] sm:$0xff]
    %v1009 = vld [vmem:[%s8 + $0x18] sm:$0xff]
    %v1010 = vld [vmem:[%s8 + $0x20] sm:$0xff]
    %v1011 = vld [vmem:[%s8 + $0x28] sm:$0xff]
    %v1012 = vld [vmem:[%s8 + $0x30] sm:$0xff]
    %v1013 = vld [vmem:[%s8 + $0x38] sm:$0xff]
    %v1014 = vld [vmem:[%s8 + $0x40] sm:$0xff]
    %v1015 = vld [vmem:[%s8 + $0x48] sm:$0xff]
    %v1016 = vld [vmem:[%s8 + $0x50] sm:$0xff]
    %v1017 = vld [vmem:[%s8 + $0x58] sm:$0xff]
    %v1018 = vld [vmem:[%s8 + $0x60] sm:$0xff]
    %v1019 = vld [vmem:[%s8 + $0x68] sm:$0xff]
    %v1020 = vld [vmem:[%s8 + $0x70] sm:$0xff]
    %v1021 = vld [vmem:[%s8 + $0x78] sm:$0xff]
    %1022 = vmatprep.subr.mxu0 0.0
    %1023 = vmatpush1.msra.mxu0 %v1006
    %1024 = vmatprep.subr.mxu0 0.0
    %1025 = vmatpush1.msra.mxu0 %v1007
    %1026 = vmatprep.subr.mxu0 0.0
    %1027 = vmatpush1.msra.mxu0 %v1008
    %1028 = vmatprep.subr.mxu0 0.0
    %1029 = vmatpush1.msra.mxu0 %v1009
    %1030 = vmatprep.subr.mxu0 0.0
    %1031 = vmatpush1.msra.mxu0 %v1010
    %1032 = vmatprep.subr.mxu0 0.0
    %1033 = vmatpush1.msra.mxu0 %v1011
    %1034 = vmatprep.subr.mxu0 0.0
    %1035 = vmatpush1.msra.mxu0 %v1012
    %1036 = vmatprep.subr.mxu0 0.0
    %1037 = vmatpush1.msra.mxu0 %v1013
    %1038 = vmatprep.subr.mxu0 0.0
    %1039 = vmatpush1.msra.mxu0 %v1014
    %1040 = vmatprep.subr.mxu0 0.0
    %1041 = vmatpush1.msra.mxu0 %v1015
    %1042 = vmatprep.subr.mxu0 0.0
    %1043 = vmatpush1.msra.mxu0 %v1016
    %1044 = vmatprep.subr.mxu0 0.0
    %1045 = vmatpush1.msra.mxu0 %v1017
    %1046 = vmatprep.subr.mxu0 0.0
    %1047 = vmatpush1.msra.mxu0 %v1018
    %1048 = vmatprep.subr.mxu0 0.0
    %1049 = vmatpush1.msra.mxu0 %v1019
    %1050 = vmatprep.subr.mxu0 0.0
    %1051 = vmatpush1.msra.mxu0 %v1020
    %1052 = vmatprep.subr.mxu0 0.0
    %1053 = vmatpush1.msra.mxu0 %v1021
    %1054 = vmatprep.subr.mxu0 0.0
    %1055 = vmatpush1.msra.mxu0 0.0
    %1056 = vmatprep.subr.mxu0 0.0
    %1057 = vmatpush1.msra.mxu0 0.0
    %1058 = vmatprep.subr.mxu0 0.0
    %1059 = vmatpush1.msra.mxu0 0.0
    %1060 = vmatprep.subr.mxu0 0.0
    %1061 = vmatpush1.msra.mxu0 0.0
    %1062 = vmatprep.subr.mxu0 0.0
    %1063 = vmatpush1.msra.mxu0 0.0
    %1064 = vmatprep.subr.mxu0 0.0
    %1065 = vmatpush1.msra.mxu0 0.0
    %1066 = vmatprep.subr.mxu0 0.0
    %1067 = vmatpush1.msra.mxu0 0.0
    %1068 = vmatprep.subr.mxu0 0.0
    %1069 = vmatpush1.msra.mxu0 0.0
    %1070 = vmatprep.subr.mxu0 0.0
    %1071 = vmatpush1.msra.mxu0 0.0
    %1072 = vmatprep.subr.mxu0 0.0
    %1073 = vmatpush1.msra.mxu0 0.0
    %1074 = vmatprep.subr.mxu0 0.0
    %1075 = vmatpush1.msra.mxu0 0.0
    %1076 = vmatprep.subr.mxu0 0.0
    %1077 = vmatpush1.msra.mxu0 0.0
    %1078 = vmatprep.subr.mxu0 0.0
    %1079 = vmatpush1.msra.mxu0 0.0
    %1080 = vmatprep.subr.mxu0 0.0
    %1081 = vmatpush1.msra.mxu0 0.0
    %1082 = vmatprep.subr.mxu0 0.0
    %1083 = vmatpush1.msra.mxu0 0.0
    %1084 = vmatprep.subr.mxu0 0.0
    %1085 = vmatpush1.msra.mxu0 0.0
    %1086 = vmatprep.mubr.f32.mxu0 0.0
    %1087 = vmatmul.mubr.f32.gmra.mrb[0].mxu0 %v988
    %v1088 = vpop.f32.mrb[0].mxu0
    %v1089 = vadd.f32 0.0, %v1088
    %v1090 = vpop.f32.mrb[0].mxu0
    %1091 = vmatprep.mubr.f32.mxu0 0.0
    %1092 = vmatmul.mubr.f32.gmra.mrb[0].mxu0 %v993
    %v1093 = vpop.f32.mrb[0].mxu0
    %v1094 = vadd.f32 0.0, %v1093
    %v1095 = vpop.f32.mrb[0].mxu0
    %1096 = vmatprep.mubr.f32.mxu0 0.0
    %1097 = vmatmul.mubr.f32.gmra.mrb[0].mxu0 %v998
    %v1098 = vpop.f32.mrb[0].mxu0
    %v1099 = vadd.f32 0.0, %v1098
    %v1100 = vpop.f32.mrb[0].mxu0
    %1101 = vmatprep.mubr.f32.mxu0 0.0
    %1102 = vmatmul.mubr.f32.gmra.mrb[0].mxu0 %v1003
    %v1103 = vpop.f32.mrb[0].mxu0
    %v1104 = vadd.f32 0.0, %v1103
    %v1105 = vpop.f32.mrb[0].mxu0
    %1106 = vdwg.mxu0
    %v1107 = vld [vmem:[%s9] sm:$0xff]
    %v1108 = vld [vmem:[%s9 + $0x8] sm:$0xff]
    %v1109 = vld [vmem:[%s9 + $0x10] sm:$0xff]
    %v1110 = vld [vmem:[%s9 + $0x18] sm:$0xff]
    %v1111 = vld [vmem:[%s9 + $0x20] sm:$0xff]
    %v1112 = vld [vmem:[%s9 + $0x28] sm:$0xff]
    %v1113 = vld [vmem:[%s9 + $0x30] sm:$0xff]
    %v1114 = vld [vmem:[%s9 + $0x38] sm:$0xff]
    %v1115 = vld [vmem:[%s9 + $0x40] sm:$0xff]
    %v1116 = vld [vmem:[%s9 + $0x48] sm:$0xff]
    %v1117 = vld [vmem:[%s9 + $0x50] sm:$0xff]
    %v1118 = vld [vmem:[%s9 + $0x58] sm:$0xff]
    %v1119 = vld [vmem:[%s9 + $0x60] sm:$0xff]
    %v1120 = vld [vmem:[%s9 + $0x68] sm:$0xff]
    %v1121 = vld [vmem:[%s9 + $0x70] sm:$0xff]
    %v1122 = vld [vmem:[%s9 + $0x78] sm:$0xff]
    %1123 = vmatprep.subr.mxu0 0.0
    %1124 = vmatpush1.msra.mxu0 %v1107
    %1125 = vmatprep.subr.mxu0 0.0
    %1126 = vmatpush1.msra.mxu0 %v1108
    %1127 = vmatprep.subr.mxu0 0.0
    %1128 = vmatpush1.msra.mxu0 %v1109
    %1129 = vmatprep.subr.mxu0 0.0
    %1130 = vmatpush1.msra.mxu0 %v1110
    %1131 = vmatprep.subr.mxu0 0.0
    %1132 = vmatpush1.msra.mxu0 %v1111
    %1133 = vmatprep.subr.mxu0 0.0
    %1134 = vmatpush1.msra.mxu0 %v1112
    %1135 = vmatprep.subr.mxu0 0.0
    %1136 = vmatpush1.msra.mxu0 %v1113
    %1137 = vmatprep.subr.mxu0 0.0
    %1138 = vmatpush1.msra.mxu0 %v1114
    %1139 = vmatprep.subr.mxu0 0.0
    %1140 = vmatpush1.msra.mxu0 %v1115
    %1141 = vmatprep.subr.mxu0 0.0
    %1142 = vmatpush1.msra.mxu0 %v1116
    %1143 = vmatprep.subr.mxu0 0.0
    %1144 = vmatpush1.msra.mxu0 %v1117
    %1145 = vmatprep.subr.mxu0 0.0
    %1146 = vmatpush1.msra.mxu0 %v1118
    %1147 = vmatprep.subr.mxu0 0.0
    %1148 = vmatpush1.msra.mxu0 %v1119
    %1149 = vmatprep.subr.mxu0 0.0
    %1150 = vmatpush1.msra.mxu0 %v1120
    %1151 = vmatprep.subr.mxu0 0.0
    %1152 = vmatpush1.msra.mxu0 %v1121
    %1153 = vmatprep.subr.mxu0 0.0
    %1154 = vmatpush1.msra.mxu0 %v1122
    %1155 = vmatprep.subr.mxu0 0.0
    %1156 = vmatpush1.msra.mxu0 0.0
    %1157 = vmatprep.subr.mxu0 0.0
    %1158 = vmatpush1.msra.mxu0 0.0
    %1159 = vmatprep.subr.mxu0 0.0
    %1160 = vmatpush1.msra.mxu0 0.0
    %1161 = vmatprep.subr.mxu0 0.0
    %1162 = vmatpush1.msra.mxu0 0.0
    %1163 = vmatprep.subr.mxu0 0.0
    %1164 = vmatpush1.msra.mxu0 0.0
    %1165 = vmatprep.subr.mxu0 0.0
    %1166 = vmatpush1.msra.mxu0 0.0
    %1167 = vmatprep.subr.mxu0 0.0
    %1168 = vmatpush1.msra.mxu0 0.0
    %1169 = vmatprep.subr.mxu0 0.0
    %1170 = vmatpush1.msra.mxu0 0.0
    %1171 = vmatprep.subr.mxu0 0.0
    %1172 = vmatpush1.msra.mxu0 0.0
    %1173 = vmatprep.subr.mxu0 0.0
    %1174 = vmatpush1.msra.mxu0 0.0
    %1175 = vmatprep.subr.mxu0 0.0
    %1176 = vmatpush1.msra.mxu0 0.0
    %1177 = vmatprep.subr.mxu0 0.0
    %1178 = vmatpush1.msra.mxu0 0.0
    %1179 = vmatprep.subr.mxu0 0.0
    %1180 = vmatpush1.msra.mxu0 0.0
    %1181 = vmatprep.subr.mxu0 0.0
    %1182 = vmatpush1.msra.mxu0 0.0
    %1183 = vmatprep.subr.mxu0 0.0
    %1184 = vmatpush1.msra.mxu0 0.0
    %1185 = vmatprep.subr.mxu0 0.0
    %1186 = vmatpush1.msra.mxu0 0.0
    %1187 = vmatprep.mubr.f32.mxu0 0.0
    %1188 = vmatmul.mubr.f32.gmra.mrb[0].mxu0 %v988
    %v1189 = vpop.f32.mrb[0].mxu0
    %v1190 = vadd.f32 0.0, %v1189
    %v1191 = vpop.f32.mrb[0].mxu0
    %1192 = vmatprep.mubr.f32.mxu0 0.0
    %1193 = vmatmul.mubr.f32.gmra.mrb[0].mxu0 %v993
    %v1194 = vpop.f32.mrb[0].mxu0
    %v1195 = vadd.f32 0.0, %v1194
    %v1196 = vpop.f32.mrb[0].mxu0
    %1197 = vmatprep.mubr.f32.mxu0 0.0
    %1198 = vmatmul.mubr.f32.gmra.mrb[0].mxu0 %v998
    %v1199 = vpop.f32.mrb[0].mxu0
    %v1200 = vadd.f32 0.0, %v1199
    %v1201 = vpop.f32.mrb[0].mxu0
    %1202 = vmatprep.mubr.f32.mxu0 0.0
    %1203 = vmatmul.mubr.f32.gmra.mrb[0].mxu0 %v1003
    %v1204 = vpop.f32.mrb[0].mxu0
    %v1205 = vadd.f32 0.0, %v1204
    %v1206 = vpop.f32.mrb[0].mxu0
    %1207 = vdwg.mxu0
    %1208 = vxpose.xlu0.b32.start [1/16] %v1089, 128
    %1209 = vxpose.xlu0.b32.cont [2/16] %v1094, 128
    %1210 = vxpose.xlu0.b32.cont [3/16] %v1099, 128
    %1211 = vxpose.xlu0.b32.cont [4/16] %v1104, 128
    %1212 = vxpose.xlu0.b32.cont [5/16] 0.0, 128
    %1213 = vxpose.xlu0.b32.cont [6/16] 0.0, 128
    %1214 = vxpose.xlu0.b32.cont [7/16] 0.0, 128
    %1215 = vxpose.xlu0.b32.cont [8/16] 0.0, 128
    %1216 = vxpose.xlu0.b32.cont [9/16] 0.0, 128
    %1217 = vxpose.xlu0.b32.cont [10/16] 0.0, 128
    %1218 = vxpose.xlu0.b32.cont [11/16] 0.0, 128
    %1219 = vxpose.xlu0.b32.cont [12/16] 0.0, 128
    %1220 = vxpose.xlu0.b32.cont [13/16] 0.0, 128
    %1221 = vxpose.xlu0.b32.cont [14/16] 0.0, 128
    %1222 = vxpose.xlu0.b32.cont [15/16] 0.0, 128
    %1223 = vxpose.xlu0.b32.end [16/16] 0.0, 128
    %v1224 = vpop.trf.xlu0
    %v1225 = vpop.trf.xlu0
    %v1226 = vpop.trf.xlu0
    %v1227 = vpop.trf.xlu0
    %v1228 = vpop.trf.xlu0
    %v1229 = vpop.trf.xlu0
    %v1230 = vpop.trf.xlu0
    %v1231 = vpop.trf.xlu0
    %v1232 = vpop.trf.xlu0
    %v1233 = vpop.trf.xlu0
    %v1234 = vpop.trf.xlu0
    %v1235 = vpop.trf.xlu0
    %v1236 = vpop.trf.xlu0
    %v1237 = vpop.trf.xlu0
    %v1238 = vpop.trf.xlu0
    %v1239 = vpop.trf.xlu0
    %1241 = vset.pattern.permute.xlu0 0
    %1242 = vperm.xlu0 %1241, %v1190
    %v1243 = vpop.permute.xlu0 %1242
    %1246 = vset.pattern.permute.xlu0 0
    %1247 = vperm.xlu0 %1246, %v1195
    %v1248 = vpop.permute.xlu0 %1247
    %1251 = vset.pattern.permute.xlu0 0
    %1252 = vperm.xlu0 %1251, %v1200
    %v1253 = vpop.permute.xlu0 %1252
    %1256 = vset.pattern.permute.xlu0 0
    %1257 = vperm.xlu0 %1256, %v1205
    %v1258 = vpop.permute.xlu0 %1257
    %v1260 = vlaneseq
    %v1261 = vshrl.u32 %v1260, 7
    %v1262 = vsub.s32 0, %v1261
    %v1263 = vrot.slane %v1224, %v1262
    %v1264 = vadd.f32 %v1243, %v1263
    %v1265 = vadd.f32 %v1248, %v1263
    %v1266 = vadd.f32 %v1253, %v1263
    %v1267 = vadd.f32 %v1258, %v1263
    %vm1268 = vcmp.gt.f32.partialorder %v1264, 0.0
    %vm1269 = vcmp.gt.f32.partialorder %v1265, 0.0
    %vm1270 = vcmp.gt.f32.partialorder %v1266, 0.0
    %vm1271 = vcmp.gt.f32.partialorder %v1267, 0.0
    %v1272 = vmul.f32 %v1264, 0.2
    %v1273 = vmul.f32 %v1265, 0.2
    %v1274 = vmul.f32 %v1266, 0.2
    %v1275 = vmul.f32 %v1267, 0.2
    %v1276 = vsel %vm1268, %v1264, %v1272
    %v1277 = vsel %vm1269, %v1265, %v1273
    %v1278 = vsel %vm1270, %v1266, %v1274
    %v1279 = vsel %vm1271, %v1267, %v1275
    %v1280 = vsel %vm47, %v1276, -1e+30
    %v1281 = vsel %vm48, %v1277, -1e+30
    %v1282 = vsel %vm49, %v1278, -1e+30
    %v1283 = vsel %vm50, %v1279, -1e+30
    %v1284 = vsel %vm155, %v1280, -inf
    %1285 = vmax.xlane.f32.xlu0 %v1284
    %v1286 = vpop.xlane.xlu0 %1285
    %v1287 = vsel %vm155, %v1281, -inf
    %1288 = vmax.xlane.f32.xlu0 %v1287
    %v1289 = vpop.xlane.xlu0 %1288
    %v1290 = vsel %vm155, %v1282, -inf
    %1291 = vmax.xlane.f32.xlu0 %v1290
    %v1292 = vpop.xlane.xlu0 %1291
    %v1293 = vsel %vm155, %v1283, -inf
    %1294 = vmax.xlane.f32.xlu0 %v1293
    %v1295 = vpop.xlane.xlu0 %1294
    %v1296 = vsub.f32 %v1280, %v1286
    %v1297 = vsub.f32 %v1281, %v1289
    %v1298 = vsub.f32 %v1282, %v1292
    %v1299 = vsub.f32 %v1283, %v1295
    %v1300 = vmul.f32 %v1296, 1.442695
    %v1301 = vpow.pop %v1300
    %v1302 = vmul.f32 %v1297, 1.442695
    %v1303 = vpow.pop %v1302
    %v1304 = vmul.f32 %v1298, 1.442695
    %v1305 = vpow.pop %v1304
    %v1306 = vmul.f32 %v1299, 1.442695
    %v1307 = vpow.pop %v1306
    %v1308 = vsel %vm155, %v1301, 0.0
    %1309 = vadd.xlane.f32.xlu0 %v1308
    %v1310 = vpop.xlane.xlu0 %1309
    %v1311 = vsel %vm155, %v1303, 0.0
    %1312 = vadd.xlane.f32.xlu0 %v1311
    %v1313 = vpop.xlane.xlu0 %1312
    %v1314 = vsel %vm155, %v1305, 0.0
    %1315 = vadd.xlane.f32.xlu0 %v1314
    %v1316 = vpop.xlane.xlu0 %1315
    %v1317 = vsel %vm155, %v1307, 0.0
    %1318 = vadd.xlane.f32.xlu0 %v1317
    %v1319 = vpop.xlane.xlu0 %1318
    %v1320 = vrcp.pop %v1310
    %v1321 = vrcp.pop %v1313
    %v1322 = vrcp.pop %v1316
    %v1323 = vrcp.pop %v1319
    %v1324 = vmul.f32 %v1301, %v1320
    %v1325 = vmul.f32 %v1303, %v1321
    %v1326 = vmul.f32 %v1305, %v1322
    %v1327 = vmul.f32 %v1307, %v1323
    %v1328 = vld [vmem:[%s10] sm:$0x1]
    %v1330 = vlaneseq
    %v1331 = vshrl.u32 %v1330, 7
    %v1332 = vsub.s32 0, %v1331
    %v1333 = vrot.slane %v1328, %v1332
    %v1336 = vsel %vm155, %v1324, 0
    %v1339 = vsel %vm155, %v1325, 0
    %v1342 = vsel %vm155, %v1326, 0
    %v1345 = vsel %vm155, %v1327, 0
    %1347 = vmatprep.subr.mxu0 0.0
    %1348 = vmatpush1.msra.mxu0 %v988
    %1349 = vmatprep.subr.mxu0 0.0
    %1350 = vmatpush1.msra.mxu0 %v993
    %1351 = vmatprep.subr.mxu0 0.0
    %1352 = vmatpush1.msra.mxu0 %v998
    %1353 = vmatprep.subr.mxu0 0.0
    %1354 = vmatpush1.msra.mxu0 %v1003
    %1355 = vmatprep.subr.mxu0 0.0
    %1356 = vmatpush1.msra.mxu0 0.0
    %1357 = vmatprep.subr.mxu0 0.0
    %1358 = vmatpush1.msra.mxu0 0.0
    %1359 = vmatprep.subr.mxu0 0.0
    %1360 = vmatpush1.msra.mxu0 0.0
    %1361 = vmatprep.subr.mxu0 0.0
    %1362 = vmatpush1.msra.mxu0 0.0
    %1363 = vmatprep.subr.mxu0 0.0
    %1364 = vmatpush1.msra.mxu0 0.0
    %1365 = vmatprep.subr.mxu0 0.0
    %1366 = vmatpush1.msra.mxu0 0.0
    %1367 = vmatprep.subr.mxu0 0.0
    %1368 = vmatpush1.msra.mxu0 0.0
    %1369 = vmatprep.subr.mxu0 0.0
    %1370 = vmatpush1.msra.mxu0 0.0
    %1371 = vmatprep.subr.mxu0 0.0
    %1372 = vmatpush1.msra.mxu0 0.0
    %1373 = vmatprep.subr.mxu0 0.0
    %1374 = vmatpush1.msra.mxu0 0.0
    %1375 = vmatprep.subr.mxu0 0.0
    %1376 = vmatpush1.msra.mxu0 0.0
    %1377 = vmatprep.subr.mxu0 0.0
    %1378 = vmatpush1.msra.mxu0 0.0
    %1379 = vmatprep.subr.mxu0 0.0
    %1380 = vmatpush1.msra.mxu0 0.0
    %1381 = vmatprep.subr.mxu0 0.0
    %1382 = vmatpush1.msra.mxu0 0.0
    %1383 = vmatprep.subr.mxu0 0.0
    %1384 = vmatpush1.msra.mxu0 0.0
    %1385 = vmatprep.subr.mxu0 0.0
    %1386 = vmatpush1.msra.mxu0 0.0
    %1387 = vmatprep.subr.mxu0 0.0
    %1388 = vmatpush1.msra.mxu0 0.0
    %1389 = vmatprep.subr.mxu0 0.0
    %1390 = vmatpush1.msra.mxu0 0.0
    %1391 = vmatprep.subr.mxu0 0.0
    %1392 = vmatpush1.msra.mxu0 0.0
    %1393 = vmatprep.subr.mxu0 0.0
    %1394 = vmatpush1.msra.mxu0 0.0
    %1395 = vmatprep.subr.mxu0 0.0
    %1396 = vmatpush1.msra.mxu0 0.0
    %1397 = vmatprep.subr.mxu0 0.0
    %1398 = vmatpush1.msra.mxu0 0.0
    %1399 = vmatprep.subr.mxu0 0.0
    %1400 = vmatpush1.msra.mxu0 0.0
    %1401 = vmatprep.subr.mxu0 0.0
    %1402 = vmatpush1.msra.mxu0 0.0
    %1403 = vmatprep.subr.mxu0 0.0
    %1404 = vmatpush1.msra.mxu0 0.0
    %1405 = vmatprep.subr.mxu0 0.0
    %1406 = vmatpush1.msra.mxu0 0.0
    %1407 = vmatprep.subr.mxu0 0.0
    %1408 = vmatpush1.msra.mxu0 0.0
    %1409 = vmatprep.subr.mxu0 0.0
    %1410 = vmatpush1.msra.mxu0 0.0
    %1411 = vmatprep.mubr.f32.mxu0 0.0
    %1412 = vmatmul.mubr.f32.gmra.mrb[0].mxu0 %v1336
    %v1413 = vpop.f32.mrb[0].mxu0
    %v1414 = vadd.f32 %v1333, %v1413
    %v1415 = vpop.f32.mrb[0].mxu0
    %1416 = vmatprep.mubr.f32.mxu0 0.0
    %1417 = vmatmul.mubr.f32.gmra.mrb[0].mxu0 %v1339
    %v1418 = vpop.f32.mrb[0].mxu0
    %v1419 = vadd.f32 %v1333, %v1418
    %v1420 = vpop.f32.mrb[0].mxu0
    %1421 = vmatprep.mubr.f32.mxu0 0.0
    %1422 = vmatmul.mubr.f32.gmra.mrb[0].mxu0 %v1342
    %v1423 = vpop.f32.mrb[0].mxu0
    %v1424 = vadd.f32 %v1333, %v1423
    %v1425 = vpop.f32.mrb[0].mxu0
    %1426 = vmatprep.mubr.f32.mxu0 0.0
    %1427 = vmatmul.mubr.f32.gmra.mrb[0].mxu0 %v1345
    %v1428 = vpop.f32.mrb[0].mxu0
    %v1429 = vadd.f32 %v1333, %v1428
    %v1430 = vpop.f32.mrb[0].mxu0
    %1431 = vdwg.mxu0
    %1432 = vst [vmem:[#allocation2] sm:$0xff] %v1414
    %1433 = vst [vmem:[#allocation2 + $0x8] sm:$0xff] %v1419
    %1434 = vst [vmem:[#allocation2 + $0x10] sm:$0xff] %v1424
    %1435 = vst [vmem:[#allocation2 + $0x18] sm:$0xff] %v1429
    // Predicated region
    $region46: #{tpu_custom_call.1} parent=1 // pred_check
      _
    $region47: #{tpu_custom_call.1} parent=1 // pred_check_branch
      %1437 = sbr.rel (0) target = $region49
    $region48: #{tpu_custom_call.1} parent=1 // pred_region
      %s1439 = ssub.s32 512, 512
      %1440 = vsyncadd [#allocation3], %s1439
      %s1441 = sshll.u32 [#allocation2], 4
      %s1442 = int_to_ptr.vmem [resolvable:$true] %s1441
      %1447 = dma.vmem_to_hbm [thread:$0]  %s1442, 512, %s11, [#allocation3], 128, 128, 8
    $region49: #{tpu_custom_call.1} parent=1 // pred_fallthru
      _
    // Predicated region
    $region50: #{tpu_custom_call.1} parent=1 // pred_check
      _
    $region51: #{tpu_custom_call.1} parent=1 // pred_check_branch
      %1449 = sbr.rel (0) target = $region53
    $region52: #{tpu_custom_call.1} parent=1 // pred_region
      %1450 = dma.done [#allocation3], 512
    $region53: #{tpu_custom_call.1} parent=1 // pred_fallthru
      _
    %1451 = vsyncpa [#allocation3], 1

</llo_original>
